<compile_context>
chip_gen: v6e
topology: v6e:2x2x1
jax: 0.10.0
libtpu: 0.0.40
codegen_flags: <defaults>
</compile_context>

<pallas_src>
import math
import jax
import jax.numpy as jnp
from jax.experimental import pallas as pl
from jax.experimental.pallas import tpu as pltpu


_INV_SQRT2 = 1.0 / math.sqrt(2.0)

# Abramowitz & Stegun 7.1.26 erf coefficients (max abs error ~1.5e-7).
_P = 0.3275911
_A1 = 0.254829592
_A2 = -0.284496736
_A3 = 1.421413741
_A4 = -1.453152027
_A5 = 1.061405429


def _round_up(n, m):
    return (n + m - 1) // m * m


def _erf_approx(u):
    """exp-based erf (A&S 7.1.26); the exp runs on the EUP slot."""
    a = jnp.abs(u)
    t = 1.0 / (1.0 + _P * a)
    poly = ((((_A5 * t + _A4) * t + _A3) * t + _A2) * t + _A1) * t
    e = 1.0 - poly * jnp.exp(-a * a)
    return jnp.where(u < 0.0, -e, e)


def _gelu_kernel(v):
    """Exact-form GELU with erf via the EUP-friendly approximation above."""
    return 0.5 * v * (1.0 + _erf_approx(v * _INV_SQRT2))


def _gelu_exact(v):
    """Reference GELU (PyTorch nn.GELU default: exact erf)."""
    return 0.5 * v * (1.0 + jax.lax.erf(v * _INV_SQRT2))


def _fused_heads_kernel(x_ref,
                        w1_ref, b1_ref, w2_ref, b2_ref,
                        w3_ref, b3_ref, w4_ref, b4_ref,
                        wp_ref, bp_ref,
                        out_ref):
    x = x_ref[...]                                                      # (tm, D)
    h = _gelu_kernel(jnp.dot(x, w1_ref[...],
                             preferred_element_type=jnp.float32) + b1_ref[...])  # (tm, 256)
    h = _gelu_kernel(jnp.dot(h, w2_ref[...],
                             preferred_element_type=jnp.float32) + b2_ref[...])  # (tm, 128)
    h = _gelu_kernel(jnp.dot(h, w3_ref[...],
                             preferred_element_type=jnp.float32) + b3_ref[...])  # (tm, 64)
    h = _gelu_kernel(jnp.dot(h, w4_ref[...],
                             preferred_element_type=jnp.float32) + b4_ref[...])  # (tm, 32)
    out_ref[...] = (jnp.dot(h, wp_ref[...],
                            preferred_element_type=jnp.float32) + bp_ref[...])   # (tm, out_pad)


def _block_diag(blocks):
    """blocks: (H, din, dout) -> block-diagonal (H*din, H*dout)."""
    H, din, dout = blocks.shape
    out = jnp.zeros((H * din, H * dout), blocks.dtype)
    for h in range(H):
        out = out.at[h * din:(h + 1) * din, h * dout:(h + 1) * dout].set(blocks[h])
    return out


def fuse_detection_head_params(params):
    """One-time packing of the four per-head MLPs plus the shared projection
    into a single fused weight chain with a lane-dense (>=128-wide) output.
    Call once at parameter-load time; pass the result to the forward."""
    (w1, b1, w2, b2, w3, b3, w4, b4, wp, bp) = params
    C = wp.shape[-1]
    out_pad = _round_up(4 * C, 128)

    w1f = jnp.concatenate([w1[h] for h in range(4)], axis=1)           # (D,   256)
    b1f = b1.reshape(1, -1)                                            # (1,   256)
    w2f = _block_diag(w2)                                              # (256, 128)
    b2f = b2.reshape(1, -1)                                            # (1,   128)
    w3f = _block_diag(w3)                                              # (128,  64)
    b3f = b3.reshape(1, -1)                                            # (1,    64)
    w4f = _block_diag(w4)                                              # (64,   32)
    b4f = b4.reshape(1, -1)                                            # (1,    32)

    wp_bd = _block_diag(jnp.broadcast_to(wp[None], (4,) + wp.shape))   # (32, 4*C)
    wpf = jnp.zeros((32, out_pad), wp.dtype).at[:, :4 * C].set(wp_bd)  # (32, out_pad)
    bpf = jnp.zeros((1, out_pad), bp.dtype).at[:, :4 * C].set(jnp.tile(bp, (1, 4)))

    fused = (w1f, b1f, w2f, b2f, w3f, b3f, w4f, b4f, wpf, bpf)
    return fused, C


def detection_heads_forward(x, fused_params, class_num, *, tile_rows=2048):
    """x: (B, S, D) float32.  fused_params: output of fuse_detection_head_params.
    Returns (B, 4, S, class_num), matching torch.stack(dim=1)."""
    B, S, D = x.shape
    C = class_num
    N = B * S
    (w1f, b1f, w2f, b2f, w3f, b3f, w4f, b4f, wpf, bpf) = fused_params
    out_pad = wpf.shape[-1]

    # --- row-tile sizing -------------------------------------------------
    # >=2 grid steps whenever N allows (v7x dual TensorCore); tile multiple of 8.
    tm = min(int(tile_rows), _round_up(-(-N // 2), 8))
    tm = max(8, (tm // 8) * 8)

    # Generation-aware VMEM budget: double-buffered x/out tiles + f32
    # intermediates (256+128+64+32 = 480 per row) + resident fused weights.
    per_row_bytes = 4 * (2 * D + 2 * out_pad + 480)
    weight_bytes = 4 * sum(int(a.size) for a in fused_params)
    try:
        phys_vmem = int(pltpu.get_tpu_info().vmem_capacity_bytes)
    except Exception:
        phys_vmem = 64 << 20            # v7x per-core VMEM (smallest generation)
    budget = min(phys_vmem // 2, 32 << 20)
    while tm > 8 and tm * per_row_bytes + weight_bytes > budget:
        tm = max(8, ((tm // 2) // 8) * 8)

    need = tm * per_row_bytes + weight_bytes + (4 << 20)
    vmem_limit = int(min(phys_vmem - (8 << 20), max(need, 16 << 20)))

    x2 = x.reshape(N, D)
    grid = (pl.cdiv(N, tm),)            # ragged last block is masked by Pallas

    def full_spec(arr):
        return pl.BlockSpec(arr.shape, lambda i: (0, 0))

    out = pl.pallas_call(
        _fused_heads_kernel,
        out_shape=jax.ShapeDtypeStruct((N, out_pad), jnp.float32),
        grid=grid,
        in_specs=[
            pl.BlockSpec((tm, D), lambda i: (i, 0)),   # x: read once per row tile
            full_spec(w1f), full_spec(b1f),
            full_spec(w2f), full_spec(b2f),
            full_spec(w3f), full_spec(b3f),
            full_spec(w4f), full_spec(b4f),
            full_spec(wpf), full_spec(bpf),
        ],
        out_specs=pl.BlockSpec((tm, out_pad), lambda i: (i, 0)),
        compiler_params=pltpu.CompilerParams(
            dimension_semantics=("parallel",),
            vmem_limit_bytes=vmem_limit),
    )(x2, w1f, b1f, w2f, b2f, w3f, b3f, w4f, b4f, wpf, bpf)

    # (N, out_pad) -> real 4*C columns -> (B, S, 4, C) -> (B, 4, S, C)
    out = out[:, :4 * C].reshape(B, S, 4, C)
    return jnp.transpose(out, (0, 2, 1, 3))


def init_params(key, input_dim, class_num):
    """Deterministic synthetic parameters, stored as (in, out) matrices."""
    dims = [(input_dim, 64), (64, 32), (32, 16), (16, 8)]
    ks = jax.random.split(key, 2 * len(dims) + 2)
    ws, bs = [], []
    for li, (din, dout) in enumerate(dims):
        scale = 1.0 / math.sqrt(din)
        w = jax.random.uniform(ks[2 * li], (4, din, dout),
                               minval=-scale, maxval=scale, dtype=jnp.float32)
        b = jax.random.uniform(ks[2 * li + 1], (4, 1, dout),
                               minval=-scale, maxval=scale, dtype=jnp.float32)
        ws.append(w)
        bs.append(b)
    scale = 1.0 / math.sqrt(8)
    wp = jax.random.uniform(ks[-2], (8, class_num),
                            minval=-scale, maxval=scale, dtype=jnp.float32)
    bp = jax.random.uniform(ks[-1], (1, class_num),
                            minval=-scale, maxval=scale, dtype=jnp.float32)
    return (ws[0], bs[0], ws[1], bs[1], ws[2], bs[2], ws[3], bs[3], wp, bp)


if __name__ == "__main__":
    B, S, INPUT_DIM, CLASS_NUM = 2, 8, 32, 5

    key = jax.random.PRNGKey(0)
    k_x, k_p = jax.random.split(key)
    x = jax.random.normal(k_x, (B, S, INPUT_DIM), dtype=jnp.float32)
    params = init_params(k_p, INPUT_DIM, CLASS_NUM)

    # One-time weight fusion (hoisted out of the per-call forward path).
    fused, C = fuse_detection_head_params(params)

    y = detection_heads_forward(x, fused, C)
    y = jax.block_until_ready(y)
    assert y.shape == (B, 4, S, CLASS_NUM), y.shape

    # Pure-JAX reference (unfused, per-head, exact-erf GELU) == PyTorch module.
    (w1, b1, w2, b2, w3, b3, w4, b4, wp, bp) = params

    def ref_forward(x):
        outs = []
        for h in range(4):
            t = x.reshape(B * S, INPUT_DIM)
            for w, b in ((w1[h], b1[h]), (w2[h], b2[h]),
                         (w3[h], b3[h]), (w4[h], b4[h])):
                t = _gelu_exact(t @ w + b)
            outs.append((t @ wp + bp).reshape(B, S, CLASS_NUM))
        return jnp.stack(outs, axis=1)

    y_ref = ref_forward(x)
    assert jnp.allclose(y, y_ref, atol=1e-4, rtol=1e-4), \
        float(jnp.max(jnp.abs(y - y_ref)))

    print("KERNEL_OK")
</pallas_src>

<mosaic_0001>
module attributes {stable_mosaic.version = 11 : i64} {
  func.func @_fused_heads_kernel(%arg0: i32, %arg1: memref<8x32xf32, #tpu.memory_space<vmem>>, %arg2: memref<32x256xf32, #tpu.memory_space<vmem>>, %arg3: memref<1x256xf32, #tpu.memory_space<vmem>>, %arg4: memref<256x128xf32, #tpu.memory_space<vmem>>, %arg5: memref<1x128xf32, #tpu.memory_space<vmem>>, %arg6: memref<128x64xf32, #tpu.memory_space<vmem>>, %arg7: memref<1x64xf32, #tpu.memory_space<vmem>>, %arg8: memref<64x32xf32, #tpu.memory_space<vmem>>, %arg9: memref<1x32xf32, #tpu.memory_space<vmem>>, %arg10: memref<32x128xf32, #tpu.memory_space<vmem>>, %arg11: memref<1x128xf32, #tpu.memory_space<vmem>>, %arg12: memref<8x128xf32, #tpu.memory_space<vmem>>) attributes {dimension_semantics = [#tpu.dimension_semantics<parallel>], iteration_bounds = array<i64: 2>, scalar_prefetch = 0 : i64, scratch_operands = 0 : i64, tpu.core_type = #tpu.core_type<tc>, window_params = [{transform_indices = @transform_0, window_bounds = array<i64: 8, 32>}, {pipeline_mode = #tpu.pipeline_mode<synchronous>, transform_indices = @transform_1, window_bounds = array<i64: 32, 256>}, {pipeline_mode = #tpu.pipeline_mode<synchronous>, transform_indices = @transform_2, window_bounds = array<i64: 1, 256>}, {pipeline_mode = #tpu.pipeline_mode<synchronous>, transform_indices = @transform_3, window_bounds = array<i64: 256, 128>}, {pipeline_mode = #tpu.pipeline_mode<synchronous>, transform_indices = @transform_4, window_bounds = array<i64: 1, 128>}, {pipeline_mode = #tpu.pipeline_mode<synchronous>, transform_indices = @transform_5, window_bounds = array<i64: 128, 64>}, {pipeline_mode = #tpu.pipeline_mode<synchronous>, transform_indices = @transform_6, window_bounds = array<i64: 1, 64>}, {pipeline_mode = #tpu.pipeline_mode<synchronous>, transform_indices = @transform_7, window_bounds = array<i64: 64, 32>}, {pipeline_mode = #tpu.pipeline_mode<synchronous>, transform_indices = @transform_8, window_bounds = array<i64: 1, 32>}, {pipeline_mode = #tpu.pipeline_mode<synchronous>, transform_indices = @transform_9, window_bounds = array<i64: 32, 128>}, {pipeline_mode = #tpu.pipeline_mode<synchronous>, transform_indices = @transform_10, window_bounds = array<i64: 1, 128>}, {transform_indices = @transform_11, window_bounds = array<i64: 8, 128>}]} {
    %c0 = arith.constant 0 : index
    %c0_0 = arith.constant 0 : index
    %0 = vector.load %arg1[%c0, %c0_0] : memref<8x32xf32, #tpu.memory_space<vmem>>, vector<8x32xf32>
    %c0_1 = arith.constant 0 : index
    %c0_2 = arith.constant 0 : index
    %1 = vector.load %arg2[%c0_1, %c0_2] : memref<32x256xf32, #tpu.memory_space<vmem>>, vector<32x256xf32>
    %cst = arith.constant dense<0.000000e+00> : vector<8x256xf32>
    %2 = tpu.matmul %0, %1, %cst {dimension_numbers = #tpu.dot_dimension_numbers<[1], [0], [0], [1], [0, 0, 1, 1], [], []>} : vector<8x32xf32>, vector<32x256xf32>, vector<8x256xf32> -> vector<8x256xf32>
    %c0_3 = arith.constant 0 : index
    %c0_4 = arith.constant 0 : index
    %3 = vector.load %arg3[%c0_3, %c0_4] : memref<1x256xf32, #tpu.memory_space<vmem>>, vector<1x256xf32>
    %4 = vector.broadcast %3 : vector<1x256xf32> to vector<8x256xf32>
    %5 = arith.addf %2, %4 : vector<8x256xf32>
    %cst_5 = arith.constant 5.000000e-01 : f32
    %6 = vector.broadcast %cst_5 : f32 to vector<8x256xf32>
    %7 = arith.mulf %6, %5 : vector<8x256xf32>
    %cst_6 = arith.constant 0.707106769 : f32
    %8 = vector.broadcast %cst_6 : f32 to vector<8x256xf32>
    %9 = arith.mulf %5, %8 : vector<8x256xf32>
    %10 = math.absf %9 : vector<8x256xf32>
    %cst_7 = arith.constant 0.327591091 : f32
    %11 = vector.broadcast %cst_7 : f32 to vector<8x256xf32>
    %12 = arith.mulf %11, %10 : vector<8x256xf32>
    %cst_8 = arith.constant 1.000000e+00 : f32
    %13 = vector.broadcast %cst_8 : f32 to vector<8x256xf32>
    %14 = arith.addf %13, %12 : vector<8x256xf32>
    %cst_9 = arith.constant 1.000000e+00 : f32
    %15 = vector.broadcast %cst_9 : f32 to vector<8x256xf32>
    %16 = arith.divf %15, %14 : vector<8x256xf32>
    %cst_10 = arith.constant 1.06140542 : f32
    %17 = vector.broadcast %cst_10 : f32 to vector<8x256xf32>
    %18 = arith.mulf %17, %16 : vector<8x256xf32>
    %cst_11 = arith.constant -1.45315206 : f32
    %19 = vector.broadcast %cst_11 : f32 to vector<8x256xf32>
    %20 = arith.addf %18, %19 : vector<8x256xf32>
    %21 = arith.mulf %20, %16 : vector<8x256xf32>
    %cst_12 = arith.constant 1.42141378 : f32
    %22 = vector.broadcast %cst_12 : f32 to vector<8x256xf32>
    %23 = arith.addf %21, %22 : vector<8x256xf32>
    %24 = arith.mulf %23, %16 : vector<8x256xf32>
    %cst_13 = arith.constant -0.284496725 : f32
    %25 = vector.broadcast %cst_13 : f32 to vector<8x256xf32>
    %26 = arith.addf %24, %25 : vector<8x256xf32>
    %27 = arith.mulf %26, %16 : vector<8x256xf32>
    %cst_14 = arith.constant 0.254829586 : f32
    %28 = vector.broadcast %cst_14 : f32 to vector<8x256xf32>
    %29 = arith.addf %27, %28 : vector<8x256xf32>
    %30 = arith.mulf %29, %16 : vector<8x256xf32>
    %cst_15 = arith.constant 0.000000e+00 : f32
    %31 = vector.broadcast %cst_15 : f32 to vector<8x256xf32>
    %32 = arith.subf %31, %10 : vector<8x256xf32>
    %33 = arith.mulf %32, %10 : vector<8x256xf32>
    %34 = math.exp %33 : vector<8x256xf32>
    %35 = arith.mulf %30, %34 : vector<8x256xf32>
    %cst_16 = arith.constant 1.000000e+00 : f32
    %36 = vector.broadcast %cst_16 : f32 to vector<8x256xf32>
    %37 = arith.subf %36, %35 : vector<8x256xf32>
    %cst_17 = arith.constant 0.000000e+00 : f32
    %38 = vector.broadcast %cst_17 : f32 to vector<8x256xf32>
    %39 = arith.cmpf olt, %9, %38 : vector<8x256xf32>
    %cst_18 = arith.constant 0.000000e+00 : f32
    %40 = vector.broadcast %cst_18 : f32 to vector<8x256xf32>
    %41 = arith.subf %40, %37 : vector<8x256xf32>
    %42 = arith.select %39, %41, %37 : vector<8x256xi1>, vector<8x256xf32>
    %cst_19 = arith.constant 1.000000e+00 : f32
    %43 = vector.broadcast %cst_19 : f32 to vector<8x256xf32>
    %44 = arith.addf %43, %42 : vector<8x256xf32>
    %45 = arith.mulf %7, %44 : vector<8x256xf32>
    %c0_20 = arith.constant 0 : index
    %c0_21 = arith.constant 0 : index
    %46 = vector.load %arg4[%c0_20, %c0_21] : memref<256x128xf32, #tpu.memory_space<vmem>>, vector<256x128xf32>
    %cst_22 = arith.constant dense<0.000000e+00> : vector<8x128xf32>
    %47 = tpu.matmul %45, %46, %cst_22 {dimension_numbers = #tpu.dot_dimension_numbers<[1], [0], [0], [1], [0, 0, 1, 1], [], []>} : vector<8x256xf32>, vector<256x128xf32>, vector<8x128xf32> -> vector<8x128xf32>
    %c0_23 = arith.constant 0 : index
    %c0_24 = arith.constant 0 : index
    %48 = vector.load %arg5[%c0_23, %c0_24] : memref<1x128xf32, #tpu.memory_space<vmem>>, vector<1x128xf32>
    %49 = vector.broadcast %48 : vector<1x128xf32> to vector<8x128xf32>
    %50 = arith.addf %47, %49 : vector<8x128xf32>
    %cst_25 = arith.constant 5.000000e-01 : f32
    %51 = vector.broadcast %cst_25 : f32 to vector<8x128xf32>
    %52 = arith.mulf %51, %50 : vector<8x128xf32>
    %cst_26 = arith.constant 0.707106769 : f32
    %53 = vector.broadcast %cst_26 : f32 to vector<8x128xf32>
    %54 = arith.mulf %50, %53 : vector<8x128xf32>
    %55 = math.absf %54 : vector<8x128xf32>
    %cst_27 = arith.constant 0.327591091 : f32
    %56 = vector.broadcast %cst_27 : f32 to vector<8x128xf32>
    %57 = arith.mulf %56, %55 : vector<8x128xf32>
    %cst_28 = arith.constant 1.000000e+00 : f32
    %58 = vector.broadcast %cst_28 : f32 to vector<8x128xf32>
    %59 = arith.addf %58, %57 : vector<8x128xf32>
    %cst_29 = arith.constant 1.000000e+00 : f32
    %60 = vector.broadcast %cst_29 : f32 to vector<8x128xf32>
    %61 = arith.divf %60, %59 : vector<8x128xf32>
    %cst_30 = arith.constant 1.06140542 : f32
    %62 = vector.broadcast %cst_30 : f32 to vector<8x128xf32>
    %63 = arith.mulf %62, %61 : vector<8x128xf32>
    %cst_31 = arith.constant -1.45315206 : f32
    %64 = vector.broadcast %cst_31 : f32 to vector<8x128xf32>
    %65 = arith.addf %63, %64 : vector<8x128xf32>
    %66 = arith.mulf %65, %61 : vector<8x128xf32>
    %cst_32 = arith.constant 1.42141378 : f32
    %67 = vector.broadcast %cst_32 : f32 to vector<8x128xf32>
    %68 = arith.addf %66, %67 : vector<8x128xf32>
    %69 = arith.mulf %68, %61 : vector<8x128xf32>
    %cst_33 = arith.constant -0.284496725 : f32
    %70 = vector.broadcast %cst_33 : f32 to vector<8x128xf32>
    %71 = arith.addf %69, %70 : vector<8x128xf32>
    %72 = arith.mulf %71, %61 : vector<8x128xf32>
    %cst_34 = arith.constant 0.254829586 : f32
    %73 = vector.broadcast %cst_34 : f32 to vector<8x128xf32>
    %74 = arith.addf %72, %73 : vector<8x128xf32>
    %75 = arith.mulf %74, %61 : vector<8x128xf32>
    %cst_35 = arith.constant 0.000000e+00 : f32
    %76 = vector.broadcast %cst_35 : f32 to vector<8x128xf32>
    %77 = arith.subf %76, %55 : vector<8x128xf32>
    %78 = arith.mulf %77, %55 : vector<8x128xf32>
    %79 = math.exp %78 : vector<8x128xf32>
    %80 = arith.mulf %75, %79 : vector<8x128xf32>
    %cst_36 = arith.constant 1.000000e+00 : f32
    %81 = vector.broadcast %cst_36 : f32 to vector<8x128xf32>
    %82 = arith.subf %81, %80 : vector<8x128xf32>
    %cst_37 = arith.constant 0.000000e+00 : f32
    %83 = vector.broadcast %cst_37 : f32 to vector<8x128xf32>
    %84 = arith.cmpf olt, %54, %83 : vector<8x128xf32>
    %cst_38 = arith.constant 0.000000e+00 : f32
    %85 = vector.broadcast %cst_38 : f32 to vector<8x128xf32>
    %86 = arith.subf %85, %82 : vector<8x128xf32>
    %87 = arith.select %84, %86, %82 : vector<8x128xi1>, vector<8x128xf32>
    %cst_39 = arith.constant 1.000000e+00 : f32
    %88 = vector.broadcast %cst_39 : f32 to vector<8x128xf32>
    %89 = arith.addf %88, %87 : vector<8x128xf32>
    %90 = arith.mulf %52, %89 : vector<8x128xf32>
    %c0_40 = arith.constant 0 : index
    %c0_41 = arith.constant 0 : index
    %91 = vector.load %arg6[%c0_40, %c0_41] : memref<128x64xf32, #tpu.memory_space<vmem>>, vector<128x64xf32>
    %cst_42 = arith.constant dense<0.000000e+00> : vector<8x64xf32>
    %92 = tpu.matmul %90, %91, %cst_42 {dimension_numbers = #tpu.dot_dimension_numbers<[1], [0], [0], [1], [0, 0, 1, 1], [], []>} : vector<8x128xf32>, vector<128x64xf32>, vector<8x64xf32> -> vector<8x64xf32>
    %c0_43 = arith.constant 0 : index
    %c0_44 = arith.constant 0 : index
    %93 = vector.load %arg7[%c0_43, %c0_44] : memref<1x64xf32, #tpu.memory_space<vmem>>, vector<1x64xf32>
    %94 = vector.broadcast %93 : vector<1x64xf32> to vector<8x64xf32>
    %95 = arith.addf %92, %94 : vector<8x64xf32>
    %cst_45 = arith.constant 5.000000e-01 : f32
    %96 = vector.broadcast %cst_45 : f32 to vector<8x64xf32>
    %97 = arith.mulf %96, %95 : vector<8x64xf32>
    %cst_46 = arith.constant 0.707106769 : f32
    %98 = vector.broadcast %cst_46 : f32 to vector<8x64xf32>
    %99 = arith.mulf %95, %98 : vector<8x64xf32>
    %100 = math.absf %99 : vector<8x64xf32>
    %cst_47 = arith.constant 0.327591091 : f32
    %101 = vector.broadcast %cst_47 : f32 to vector<8x64xf32>
    %102 = arith.mulf %101, %100 : vector<8x64xf32>
    %cst_48 = arith.constant 1.000000e+00 : f32
    %103 = vector.broadcast %cst_48 : f32 to vector<8x64xf32>
    %104 = arith.addf %103, %102 : vector<8x64xf32>
    %cst_49 = arith.constant 1.000000e+00 : f32
    %105 = vector.broadcast %cst_49 : f32 to vector<8x64xf32>
    %106 = arith.divf %105, %104 : vector<8x64xf32>
    %cst_50 = arith.constant 1.06140542 : f32
    %107 = vector.broadcast %cst_50 : f32 to vector<8x64xf32>
    %108 = arith.mulf %107, %106 : vector<8x64xf32>
    %cst_51 = arith.constant -1.45315206 : f32
    %109 = vector.broadcast %cst_51 : f32 to vector<8x64xf32>
    %110 = arith.addf %108, %109 : vector<8x64xf32>
    %111 = arith.mulf %110, %106 : vector<8x64xf32>
    %cst_52 = arith.constant 1.42141378 : f32
    %112 = vector.broadcast %cst_52 : f32 to vector<8x64xf32>
    %113 = arith.addf %111, %112 : vector<8x64xf32>
    %114 = arith.mulf %113, %106 : vector<8x64xf32>
    %cst_53 = arith.constant -0.284496725 : f32
    %115 = vector.broadcast %cst_53 : f32 to vector<8x64xf32>
    %116 = arith.addf %114, %115 : vector<8x64xf32>
    %117 = arith.mulf %116, %106 : vector<8x64xf32>
    %cst_54 = arith.constant 0.254829586 : f32
    %118 = vector.broadcast %cst_54 : f32 to vector<8x64xf32>
    %119 = arith.addf %117, %118 : vector<8x64xf32>
    %120 = arith.mulf %119, %106 : vector<8x64xf32>
    %cst_55 = arith.constant 0.000000e+00 : f32
    %121 = vector.broadcast %cst_55 : f32 to vector<8x64xf32>
    %122 = arith.subf %121, %100 : vector<8x64xf32>
    %123 = arith.mulf %122, %100 : vector<8x64xf32>
    %124 = math.exp %123 : vector<8x64xf32>
    %125 = arith.mulf %120, %124 : vector<8x64xf32>
    %cst_56 = arith.constant 1.000000e+00 : f32
    %126 = vector.broadcast %cst_56 : f32 to vector<8x64xf32>
    %127 = arith.subf %126, %125 : vector<8x64xf32>
    %cst_57 = arith.constant 0.000000e+00 : f32
    %128 = vector.broadcast %cst_57 : f32 to vector<8x64xf32>
    %129 = arith.cmpf olt, %99, %128 : vector<8x64xf32>
    %cst_58 = arith.constant 0.000000e+00 : f32
    %130 = vector.broadcast %cst_58 : f32 to vector<8x64xf32>
    %131 = arith.subf %130, %127 : vector<8x64xf32>
    %132 = arith.select %129, %131, %127 : vector<8x64xi1>, vector<8x64xf32>
    %cst_59 = arith.constant 1.000000e+00 : f32
    %133 = vector.broadcast %cst_59 : f32 to vector<8x64xf32>
    %134 = arith.addf %133, %132 : vector<8x64xf32>
    %135 = arith.mulf %97, %134 : vector<8x64xf32>
    %c0_60 = arith.constant 0 : index
    %c0_61 = arith.constant 0 : index
    %136 = vector.load %arg8[%c0_60, %c0_61] : memref<64x32xf32, #tpu.memory_space<vmem>>, vector<64x32xf32>
    %cst_62 = arith.constant dense<0.000000e+00> : vector<8x32xf32>
    %137 = tpu.matmul %135, %136, %cst_62 {dimension_numbers = #tpu.dot_dimension_numbers<[1], [0], [0], [1], [0, 0, 1, 1], [], []>} : vector<8x64xf32>, vector<64x32xf32>, vector<8x32xf32> -> vector<8x32xf32>
    %c0_63 = arith.constant 0 : index
    %c0_64 = arith.constant 0 : index
    %138 = vector.load %arg9[%c0_63, %c0_64] : memref<1x32xf32, #tpu.memory_space<vmem>>, vector<1x32xf32>
    %139 = vector.broadcast %138 : vector<1x32xf32> to vector<8x32xf32>
    %140 = arith.addf %137, %139 : vector<8x32xf32>
    %cst_65 = arith.constant 5.000000e-01 : f32
    %141 = vector.broadcast %cst_65 : f32 to vector<8x32xf32>
    %142 = arith.mulf %141, %140 : vector<8x32xf32>
    %cst_66 = arith.constant 0.707106769 : f32
    %143 = vector.broadcast %cst_66 : f32 to vector<8x32xf32>
    %144 = arith.mulf %140, %143 : vector<8x32xf32>
    %145 = math.absf %144 : vector<8x32xf32>
    %cst_67 = arith.constant 0.327591091 : f32
    %146 = vector.broadcast %cst_67 : f32 to vector<8x32xf32>
    %147 = arith.mulf %146, %145 : vector<8x32xf32>
    %cst_68 = arith.constant 1.000000e+00 : f32
    %148 = vector.broadcast %cst_68 : f32 to vector<8x32xf32>
    %149 = arith.addf %148, %147 : vector<8x32xf32>
    %cst_69 = arith.constant 1.000000e+00 : f32
    %150 = vector.broadcast %cst_69 : f32 to vector<8x32xf32>
    %151 = arith.divf %150, %149 : vector<8x32xf32>
    %cst_70 = arith.constant 1.06140542 : f32
    %152 = vector.broadcast %cst_70 : f32 to vector<8x32xf32>
    %153 = arith.mulf %152, %151 : vector<8x32xf32>
    %cst_71 = arith.constant -1.45315206 : f32
    %154 = vector.broadcast %cst_71 : f32 to vector<8x32xf32>
    %155 = arith.addf %153, %154 : vector<8x32xf32>
    %156 = arith.mulf %155, %151 : vector<8x32xf32>
    %cst_72 = arith.constant 1.42141378 : f32
    %157 = vector.broadcast %cst_72 : f32 to vector<8x32xf32>
    %158 = arith.addf %156, %157 : vector<8x32xf32>
    %159 = arith.mulf %158, %151 : vector<8x32xf32>
    %cst_73 = arith.constant -0.284496725 : f32
    %160 = vector.broadcast %cst_73 : f32 to vector<8x32xf32>
    %161 = arith.addf %159, %160 : vector<8x32xf32>
    %162 = arith.mulf %161, %151 : vector<8x32xf32>
    %cst_74 = arith.constant 0.254829586 : f32
    %163 = vector.broadcast %cst_74 : f32 to vector<8x32xf32>
    %164 = arith.addf %162, %163 : vector<8x32xf32>
    %165 = arith.mulf %164, %151 : vector<8x32xf32>
    %cst_75 = arith.constant 0.000000e+00 : f32
    %166 = vector.broadcast %cst_75 : f32 to vector<8x32xf32>
    %167 = arith.subf %166, %145 : vector<8x32xf32>
    %168 = arith.mulf %167, %145 : vector<8x32xf32>
    %169 = math.exp %168 : vector<8x32xf32>
    %170 = arith.mulf %165, %169 : vector<8x32xf32>
    %cst_76 = arith.constant 1.000000e+00 : f32
    %171 = vector.broadcast %cst_76 : f32 to vector<8x32xf32>
    %172 = arith.subf %171, %170 : vector<8x32xf32>
    %cst_77 = arith.constant 0.000000e+00 : f32
    %173 = vector.broadcast %cst_77 : f32 to vector<8x32xf32>
    %174 = arith.cmpf olt, %144, %173 : vector<8x32xf32>
    %cst_78 = arith.constant 0.000000e+00 : f32
    %175 = vector.broadcast %cst_78 : f32 to vector<8x32xf32>
    %176 = arith.subf %175, %172 : vector<8x32xf32>
    %177 = arith.select %174, %176, %172 : vector<8x32xi1>, vector<8x32xf32>
    %cst_79 = arith.constant 1.000000e+00 : f32
    %178 = vector.broadcast %cst_79 : f32 to vector<8x32xf32>
    %179 = arith.addf %178, %177 : vector<8x32xf32>
    %180 = arith.mulf %142, %179 : vector<8x32xf32>
    %c0_80 = arith.constant 0 : index
    %c0_81 = arith.constant 0 : index
    %181 = vector.load %arg10[%c0_80, %c0_81] : memref<32x128xf32, #tpu.memory_space<vmem>>, vector<32x128xf32>
    %cst_82 = arith.constant dense<0.000000e+00> : vector<8x128xf32>
    %182 = tpu.matmul %180, %181, %cst_82 {dimension_numbers = #tpu.dot_dimension_numbers<[1], [0], [0], [1], [0, 0, 1, 1], [], []>} : vector<8x32xf32>, vector<32x128xf32>, vector<8x128xf32> -> vector<8x128xf32>
    %c0_83 = arith.constant 0 : index
    %c0_84 = arith.constant 0 : index
    %183 = vector.load %arg11[%c0_83, %c0_84] : memref<1x128xf32, #tpu.memory_space<vmem>>, vector<1x128xf32>
    %184 = vector.broadcast %183 : vector<1x128xf32> to vector<8x128xf32>
    %185 = arith.addf %182, %184 : vector<8x128xf32>
    %c0_85 = arith.constant 0 : index
    %c0_86 = arith.constant 0 : index
    %186 = vector.load %arg12[%c0_85, %c0_86] : memref<8x128xf32, #tpu.memory_space<vmem>>, vector<8x128xf32>
    tpu.vector_store %arg12[%c0_85, %c0_86], %185 {strides = array<i32>} : memref<8x128xf32, #tpu.memory_space<vmem>>, vector<8x128xf32>,
    return
  }
  func.func @transform_0(%arg0: i32) -> (i32, i32) {
    %c0_i32 = arith.constant 0 : i32
    %c0_i32_0 = arith.constant 0 : i32
    return %arg0, %c0_i32 : i32, i32
  }
  func.func @transform_1(%arg0: i32) -> (i32, i32) {
    %c0_i32 = arith.constant 0 : i32
    %c0_i32_0 = arith.constant 0 : i32
    %c0_i32_1 = arith.constant 0 : i32
    return %c0_i32, %c0_i32_0 : i32, i32
  }
  func.func @transform_2(%arg0: i32) -> (i32, i32) {
    %c0_i32 = arith.constant 0 : i32
    %c0_i32_0 = arith.constant 0 : i32
    %c0_i32_1 = arith.constant 0 : i32
    return %c0_i32, %c0_i32_0 : i32, i32
  }
  func.func @transform_3(%arg0: i32) -> (i32, i32) {
    %c0_i32 = arith.constant 0 : i32
    %c0_i32_0 = arith.constant 0 : i32
    %c0_i32_1 = arith.constant 0 : i32
    return %c0_i32, %c0_i32_0 : i32, i32
  }
  func.func @transform_4(%arg0: i32) -> (i32, i32) {
    %c0_i32 = arith.constant 0 : i32
    %c0_i32_0 = arith.constant 0 : i32
    %c0_i32_1 = arith.constant 0 : i32
    return %c0_i32, %c0_i32_0 : i32, i32
  }
  func.func @transform_5(%arg0: i32) -> (i32, i32) {
    %c0_i32 = arith.constant 0 : i32
    %c0_i32_0 = arith.constant 0 : i32
    %c0_i32_1 = arith.constant 0 : i32
    return %c0_i32, %c0_i32_0 : i32, i32
  }
  func.func @transform_6(%arg0: i32) -> (i32, i32) {
    %c0_i32 = arith.constant 0 : i32
    %c0_i32_0 = arith.constant 0 : i32
    %c0_i32_1 = arith.constant 0 : i32
    return %c0_i32, %c0_i32_0 : i32, i32
  }
  func.func @transform_7(%arg0: i32) -> (i32, i32) {
    %c0_i32 = arith.constant 0 : i32
    %c0_i32_0 = arith.constant 0 : i32
    %c0_i32_1 = arith.constant 0 : i32
    return %c0_i32, %c0_i32_0 : i32, i32
  }
  func.func @transform_8(%arg0: i32) -> (i32, i32) {
    %c0_i32 = arith.constant 0 : i32
    %c0_i32_0 = arith.constant 0 : i32
    %c0_i32_1 = arith.constant 0 : i32
    return %c0_i32, %c0_i32_0 : i32, i32
  }
  func.func @transform_9(%arg0: i32) -> (i32, i32) {
    %c0_i32 = arith.constant 0 : i32
    %c0_i32_0 = arith.constant 0 : i32
    %c0_i32_1 = arith.constant 0 : i32
    return %c0_i32, %c0_i32_0 : i32, i32
  }
  func.func @transform_10(%arg0: i32) -> (i32, i32) {
    %c0_i32 = arith.constant 0 : i32
    %c0_i32_0 = arith.constant 0 : i32
    %c0_i32_1 = arith.constant 0 : i32
    return %c0_i32, %c0_i32_0 : i32, i32
  }
  func.func @transform_11(%arg0: i32) -> (i32, i32) {
    %c0_i32 = arith.constant 0 : i32
    %c0_i32_0 = arith.constant 0 : i32
    return %arg0, %c0_i32 : i32, i32
  }
}

</mosaic_0001>

<llo_original>
// kernel: tpu_custom_call.1
$region0: #{tpu_custom_call.1}
  #allocation0 [shape = 'u32[]', space=smem, size = 0x4, offset = 0x4, fixed_abs, tag = 'smem constant byte address 0x4 - core index']
  #allocation1 [shape = 'u32[144,128]{1,0:T(1,128)}', space=vmem, size = 0x12000, scoped, tag = 'internal scratch']
  %s0 = inlined_call_operand.hbm [shape: f32[16,32], index: 0, kind: input, shape index: {}]
  %s1 = inlined_call_operand.hbm [shape: f32[32,256], index: 1, kind: input, shape index: {}]
  %s2 = inlined_call_operand.vmem [shape: f32[1,256], index: 2, kind: input, shape index: {}]
  %s3 = inlined_call_operand.vmem [shape: f32[256,128], index: 3, kind: input, shape index: {}]
  %s4 = inlined_call_operand.vmem [shape: f32[1,128], index: 4, kind: input, shape index: {}]
  %s5 = inlined_call_operand.vmem [shape: f32[128,64], index: 5, kind: input, shape index: {}]
  %s6 = inlined_call_operand.vmem [shape: f32[1,64], index: 6, kind: input, shape index: {}]
  %s7 = inlined_call_operand.vmem [shape: f32[64,32], index: 7, kind: input, shape index: {}]
  %s8 = inlined_call_operand.vmem [shape: f32[1,32], index: 8, kind: input, shape index: {}]
  %s9 = inlined_call_operand.vmem [shape: f32[32,128], index: 9, kind: input, shape index: {}]
  %s10 = inlined_call_operand.vmem [shape: f32[1,128], index: 10, kind: input, shape index: {}]
  %s11 = inlined_call_operand.hbm [shape: f32[16,128], index: 11, kind: output, shape index: {}]
  %s12 = sld [smem:[#allocation0]]
  $region85: #{tpu_custom_call.1} parent=0
    _
  %s14 = ssub.s32 1, %s12
  %s15 = scalar_select 0, %s14, %s12
  $region1: #{tpu_custom_call.1} parent=0
    #allocation2 [shape = 'u8[8192]{0}', space=vmem, size = 0x2000, scoped, tag = 'input window, operand 0']
    #allocation3 [shape = 's32[2]{0}', space=sflag, size = 0x8, scoped, tag = 'scoped memory for tpu_custom_call.1']
    #allocation4 [shape = 's32[2]{0}', space=sflag, size = 0x8, scoped, tag = 'scoped memory for tpu_custom_call.1']
    #allocation5 [shape = 'u8[32768]{0}', space=vmem, size = 0x8000, scoped, tag = 'input window, operand 1, single buffered']
    #allocation6 [shape = 's32[1]{0}', space=sflag, size = 0x4, scoped, tag = 'scoped memory for tpu_custom_call.1']
    #allocation7 [shape = 'u8[8192]{0}', space=vmem, size = 0x2000, scoped, tag = 'output window, operand 0']
    %16 = vsyncpa [#allocation3], 0
    %s17 = scalar_lea.sflag [#allocation3], 1
    %18 = vsyncpa %s17, 0
    %19 = vsyncpa [#allocation6], 0
    %20 = vsyncpa [#allocation4], 0
    %s21 = scalar_lea.sflag [#allocation4], 1
    %22 = vsyncpa %s21, 0
    loop: start=0, step=1, limit=4
    $region2: #{tpu_custom_call.1} parent=1 // loop_pre_header
      _
    $region3: #{tpu_custom_call.1} parent=1 // loop_header
      %s24 = sphi 0, %s28
      %p25 = scmp.ge.s32.totalorder %s24, 4
      %s34 = sphi 0, %s36
      %s37 = sphi 0, %s34
      %s38 = sphi 0, %s37
      %s54 = sphi 0, %s38
      %s58 = sphi 0, %s58
      %s60 = sphi 0, %s58
      %s61 = sphi 0, %s60
      %s75 = sphi 0, %s61
      %s79 = sphi 0, %s79
      %s81 = sphi 0, %s79
      %s82 = sphi 0, %s81
      %s96 = sphi 0, %s82
      %s100 = sphi 0, %s100
      %s102 = sphi 0, %s100
      %s103 = sphi 0, %s102
      %s117 = sphi 0, %s103
      %s121 = sphi 0, %s121
      %s123 = sphi 0, %s121
      %s124 = sphi 0, %s123
      %s138 = sphi 0, %s124
      %s142 = sphi 0, %s142
      %s144 = sphi 0, %s142
      %s145 = sphi 0, %s144
      %s159 = sphi 0, %s145
      %s163 = sphi 0, %s163
      %s165 = sphi 0, %s163
      %s166 = sphi 0, %s165
      %s180 = sphi 0, %s166
      %s184 = sphi 0, %s184
      %s186 = sphi 0, %s184
      %s187 = sphi 0, %s186
      %s201 = sphi 0, %s187
      %s205 = sphi 0, %s205
      %s207 = sphi 0, %s205
      %s208 = sphi 0, %s207
      %s222 = sphi 0, %s208
      %s226 = sphi 0, %s226
      %s228 = sphi 0, %s226
      %s229 = sphi 0, %s228
      %s243 = sphi 0, %s229
      %s247 = sphi 0, %s247
      %s249 = sphi 0, %s247
      %s250 = sphi 0, %s249
      %s264 = sphi 0, %s250
      %s270 = sphi 0, %s272
      %s273 = sphi 0, %s270
      %s274 = sphi 0, %s273
      %s290 = sphi 0, %s274
    $region4: #{tpu_custom_call.1} parent=1 // loop_header_branch
      %27 = sbr.rel (%p25) target = $region8
    $region5: #{tpu_custom_call.1} parent=1 // loop_body
      %s29 = ssub.s32 %s24, 1
      %s30 = ssub.s32 %s24, 2
      %s31 = sadd.s32 %s24, 1
      %s32 = ssub.s32 %s24, %s31
      %p33 = scmp.eq.s32.totalorder %s32, 0
      %s35 = sadd.s32 %s34, 1
      %s36 = scalar_select %p33, %s34, %s35
      %p39 = pneg %p33
      %p40 = scmp.eq.s32.totalorder %s24, 1
      %p41 = por %p39, %p40
      %p42 = scmp.ne.s32.totalorder %s34, %s37
      %p43 = scmp.eq.s32.totalorder %s24, 0
      %p44 = por %p42, %p43
      %p45 = scmp.ne.s32.totalorder %s34, %s37
      %p46 = scmp.eq.s32.totalorder %s29, 1
      %p47 = por %p45, %p46
      %p48 = scmp.ne.s32.totalorder %s37, %s38
      %p49 = scmp.eq.s32.totalorder %s29, 0
      %p50 = por %p48, %p49
      %p51 = scmp.ne.s32.totalorder %s37, %s38
      %p52 = scmp.eq.s32.totalorder %s30, 1
      %p53 = por %p51, %p52
      %p55 = scmp.ne.s32.totalorder %s38, %s54
      %p56 = scmp.eq.s32.totalorder %s30, 0
      %p57 = por %p55, %p56
      %s59 = sadd.s32 %s58, 1
      %p62 = scmp.eq.s32.totalorder %s24, 1
      %p63 = scmp.ne.s32.totalorder %s58, %s60
      %p64 = scmp.eq.s32.totalorder %s24, 0
      %p65 = por %p63, %p64
      %p66 = scmp.ne.s32.totalorder %s58, %s60
      %p67 = scmp.eq.s32.totalorder %s29, 1
      %p68 = por %p66, %p67
      %p69 = scmp.ne.s32.totalorder %s60, %s61
      %p70 = scmp.eq.s32.totalorder %s29, 0
      %p71 = por %p69, %p70
      %p72 = scmp.ne.s32.totalorder %s60, %s61
      %p73 = scmp.eq.s32.totalorder %s30, 1
      %p74 = por %p72, %p73
      %p76 = scmp.ne.s32.totalorder %s61, %s75
      %p77 = scmp.eq.s32.totalorder %s30, 0
      %p78 = por %p76, %p77
      %s80 = sadd.s32 %s79, 1
      %p83 = scmp.eq.s32.totalorder %s24, 1
      %p84 = scmp.ne.s32.totalorder %s79, %s81
      %p85 = scmp.eq.s32.totalorder %s24, 0
      %p86 = por %p84, %p85
      %p87 = scmp.ne.s32.totalorder %s79, %s81
      %p88 = scmp.eq.s32.totalorder %s29, 1
      %p89 = por %p87, %p88
      %p90 = scmp.ne.s32.totalorder %s81, %s82
      %p91 = scmp.eq.s32.totalorder %s29, 0
      %p92 = por %p90, %p91
      %p93 = scmp.ne.s32.totalorder %s81, %s82
      %p94 = scmp.eq.s32.totalorder %s30, 1
      %p95 = por %p93, %p94
      %p97 = scmp.ne.s32.totalorder %s82, %s96
      %p98 = scmp.eq.s32.totalorder %s30, 0
      %p99 = por %p97, %p98
      %s101 = sadd.s32 %s100, 1
      %p104 = scmp.eq.s32.totalorder %s24, 1
      %p105 = scmp.ne.s32.totalorder %s100, %s102
      %p106 = scmp.eq.s32.totalorder %s24, 0
      %p107 = por %p105, %p106
      %p108 = scmp.ne.s32.totalorder %s100, %s102
      %p109 = scmp.eq.s32.totalorder %s29, 1
      %p110 = por %p108, %p109
      %p111 = scmp.ne.s32.totalorder %s102, %s103
      %p112 = scmp.eq.s32.totalorder %s29, 0
      %p113 = por %p111, %p112
      %p114 = scmp.ne.s32.totalorder %s102, %s103
      %p115 = scmp.eq.s32.totalorder %s30, 1
      %p116 = por %p114, %p115
      %p118 = scmp.ne.s32.totalorder %s103, %s117
      %p119 = scmp.eq.s32.totalorder %s30, 0
      %p120 = por %p118, %p119
      %s122 = sadd.s32 %s121, 1
      %p125 = scmp.eq.s32.totalorder %s24, 1
      %p126 = scmp.ne.s32.totalorder %s121, %s123
      %p127 = scmp.eq.s32.totalorder %s24, 0
      %p128 = por %p126, %p127
      %p129 = scmp.ne.s32.totalorder %s121, %s123
      %p130 = scmp.eq.s32.totalorder %s29, 1
      %p131 = por %p129, %p130
      %p132 = scmp.ne.s32.totalorder %s123, %s124
      %p133 = scmp.eq.s32.totalorder %s29, 0
      %p134 = por %p132, %p133
      %p135 = scmp.ne.s32.totalorder %s123, %s124
      %p136 = scmp.eq.s32.totalorder %s30, 1
      %p137 = por %p135, %p136
      %p139 = scmp.ne.s32.totalorder %s124, %s138
      %p140 = scmp.eq.s32.totalorder %s30, 0
      %p141 = por %p139, %p140
      %s143 = sadd.s32 %s142, 1
      %p146 = scmp.eq.s32.totalorder %s24, 1
      %p147 = scmp.ne.s32.totalorder %s142, %s144
      %p148 = scmp.eq.s32.totalorder %s24, 0
      %p149 = por %p147, %p148
      %p150 = scmp.ne.s32.totalorder %s142, %s144
      %p151 = scmp.eq.s32.totalorder %s29, 1
      %p152 = por %p150, %p151
      %p153 = scmp.ne.s32.totalorder %s144, %s145
      %p154 = scmp.eq.s32.totalorder %s29, 0
      %p155 = por %p153, %p154
      %p156 = scmp.ne.s32.totalorder %s144, %s145
      %p157 = scmp.eq.s32.totalorder %s30, 1
      %p158 = por %p156, %p157
      %p160 = scmp.ne.s32.totalorder %s145, %s159
      %p161 = scmp.eq.s32.totalorder %s30, 0
      %p162 = por %p160, %p161
      %s164 = sadd.s32 %s163, 1
      %p167 = scmp.eq.s32.totalorder %s24, 1
      %p168 = scmp.ne.s32.totalorder %s163, %s165
      %p169 = scmp.eq.s32.totalorder %s24, 0
      %p170 = por %p168, %p169
      %p171 = scmp.ne.s32.totalorder %s163, %s165
      %p172 = scmp.eq.s32.totalorder %s29, 1
      %p173 = por %p171, %p172
      %p174 = scmp.ne.s32.totalorder %s165, %s166
      %p175 = scmp.eq.s32.totalorder %s29, 0
      %p176 = por %p174, %p175
      %p177 = scmp.ne.s32.totalorder %s165, %s166
      %p178 = scmp.eq.s32.totalorder %s30, 1
      %p179 = por %p177, %p178
      %p181 = scmp.ne.s32.totalorder %s166, %s180
      %p182 = scmp.eq.s32.totalorder %s30, 0
      %p183 = por %p181, %p182
      %s185 = sadd.s32 %s184, 1
      %p188 = scmp.eq.s32.totalorder %s24, 1
      %p189 = scmp.ne.s32.totalorder %s184, %s186
      %p190 = scmp.eq.s32.totalorder %s24, 0
      %p191 = por %p189, %p190
      %p192 = scmp.ne.s32.totalorder %s184, %s186
      %p193 = scmp.eq.s32.totalorder %s29, 1
      %p194 = por %p192, %p193
      %p195 = scmp.ne.s32.totalorder %s186, %s187
      %p196 = scmp.eq.s32.totalorder %s29, 0
      %p197 = por %p195, %p196
      %p198 = scmp.ne.s32.totalorder %s186, %s187
      %p199 = scmp.eq.s32.totalorder %s30, 1
      %p200 = por %p198, %p199
      %p202 = scmp.ne.s32.totalorder %s187, %s201
      %p203 = scmp.eq.s32.totalorder %s30, 0
      %p204 = por %p202, %p203
      %s206 = sadd.s32 %s205, 1
      %p209 = scmp.eq.s32.totalorder %s24, 1
      %p210 = scmp.ne.s32.totalorder %s205, %s207
      %p211 = scmp.eq.s32.totalorder %s24, 0
      %p212 = por %p210, %p211
      %p213 = scmp.ne.s32.totalorder %s205, %s207
      %p214 = scmp.eq.s32.totalorder %s29, 1
      %p215 = por %p213, %p214
      %p216 = scmp.ne.s32.totalorder %s207, %s208
      %p217 = scmp.eq.s32.totalorder %s29, 0
      %p218 = por %p216, %p217
      %p219 = scmp.ne.s32.totalorder %s207, %s208
      %p220 = scmp.eq.s32.totalorder %s30, 1
      %p221 = por %p219, %p220
      %p223 = scmp.ne.s32.totalorder %s208, %s222
      %p224 = scmp.eq.s32.totalorder %s30, 0
      %p225 = por %p223, %p224
      %s227 = sadd.s32 %s226, 1
      %p230 = scmp.eq.s32.totalorder %s24, 1
      %p231 = scmp.ne.s32.totalorder %s226, %s228
      %p232 = scmp.eq.s32.totalorder %s24, 0
      %p233 = por %p231, %p232
      %p234 = scmp.ne.s32.totalorder %s226, %s228
      %p235 = scmp.eq.s32.totalorder %s29, 1
      %p236 = por %p234, %p235
      %p237 = scmp.ne.s32.totalorder %s228, %s229
      %p238 = scmp.eq.s32.totalorder %s29, 0
      %p239 = por %p237, %p238
      %p240 = scmp.ne.s32.totalorder %s228, %s229
      %p241 = scmp.eq.s32.totalorder %s30, 1
      %p242 = por %p240, %p241
      %p244 = scmp.ne.s32.totalorder %s229, %s243
      %p245 = scmp.eq.s32.totalorder %s30, 0
      %p246 = por %p244, %p245
      %s248 = sadd.s32 %s247, 1
      %p251 = scmp.eq.s32.totalorder %s24, 1
      %p252 = scmp.ne.s32.totalorder %s247, %s249
      %p253 = scmp.eq.s32.totalorder %s24, 0
      %p254 = por %p252, %p253
      %p255 = scmp.ne.s32.totalorder %s247, %s249
      %p256 = scmp.eq.s32.totalorder %s29, 1
      %p257 = por %p255, %p256
      %p258 = scmp.ne.s32.totalorder %s249, %s250
      %p259 = scmp.eq.s32.totalorder %s29, 0
      %p260 = por %p258, %p259
      %p261 = scmp.ne.s32.totalorder %s249, %s250
      %p262 = scmp.eq.s32.totalorder %s30, 1
      %p263 = por %p261, %p262
      %p265 = scmp.ne.s32.totalorder %s250, %s264
      %p266 = scmp.eq.s32.totalorder %s30, 0
      %p267 = por %p265, %p266
      %s268 = ssub.s32 %s24, %s31
      %p269 = scmp.eq.s32.totalorder %s268, 0
      %s271 = sadd.s32 %s270, 1
      %s272 = scalar_select %p269, %s270, %s271
      %p275 = pneg %p269
      %p276 = scmp.eq.s32.totalorder %s24, 1
      %p277 = por %p275, %p276
      %p278 = scmp.ne.s32.totalorder %s270, %s273
      %p279 = scmp.eq.s32.totalorder %s24, 0
      %p280 = por %p278, %p279
      %p281 = scmp.ne.s32.totalorder %s270, %s273
      %p282 = scmp.eq.s32.totalorder %s29, 1
      %p283 = por %p281, %p282
      %p284 = scmp.ne.s32.totalorder %s273, %s274
      %p285 = scmp.eq.s32.totalorder %s29, 0
      %p286 = por %p284, %p285
      %p287 = scmp.ne.s32.totalorder %s273, %s274
      %p288 = scmp.eq.s32.totalorder %s30, 1
      %p289 = por %p287, %p288
      %p291 = scmp.ne.s32.totalorder %s274, %s290
      %p292 = scmp.eq.s32.totalorder %s30, 0
      %p293 = por %p291, %p292
      %p294 = scmp.le.s32.totalorder 1, %s24
      %p295 = scmp.lt.s32.totalorder %s24, 3
      %p296 = pnand %p294, %p295
      %p297 = pneg %p296
      // Predicated region
      $region9: #{tpu_custom_call.1} parent=5 // pred_check
        _
      $region10: #{tpu_custom_call.1} parent=5 // pred_check_branch
        %299 = sbr.rel (%p296) target = $region12
      $region11: #{tpu_custom_call.1} parent=5 // pred_region
        %s300 = ssub.s32 %s24, 1
        // Predicated region
        $region13: #{tpu_custom_call.1} parent=11 // pred_check
          %p301 = pneg %p71
        $region14: #{tpu_custom_call.1} parent=11 // pred_check_branch
          %303 = sbr.rel (%p301) target = $region16
        $region15: #{tpu_custom_call.1} parent=11 // pred_region
          %s305 = ssub.s32 1024, 1024
          %306 = vsyncadd [#allocation6], %s305
          %s307 = sshll.u32 [#allocation5], 4
          %s308 = int_to_ptr.vmem [resolvable:$true] %s307
          %313 = dma.hbm_to_vmem [thread:$0]  %s1, 1024, %s308, [#allocation6], 256, 256, 16
        $region16: #{tpu_custom_call.1} parent=11 // pred_fallthru
          _
        // Predicated region
        $region17: #{tpu_custom_call.1} parent=11 // pred_check
          %p314 = pneg %p92
        $region18: #{tpu_custom_call.1} parent=11 // pred_check_branch
          %316 = sbr.rel (%p314) target = $region20
        $region19: #{tpu_custom_call.1} parent=11 // pred_region
          _
        $region20: #{tpu_custom_call.1} parent=11 // pred_fallthru
          _
        // Predicated region
        $region21: #{tpu_custom_call.1} parent=11 // pred_check
          %p317 = pneg %p113
        $region22: #{tpu_custom_call.1} parent=11 // pred_check_branch
          %319 = sbr.rel (%p317) target = $region24
        $region23: #{tpu_custom_call.1} parent=11 // pred_region
          _
        $region24: #{tpu_custom_call.1} parent=11 // pred_fallthru
          _
        // Predicated region
        $region25: #{tpu_custom_call.1} parent=11 // pred_check
          %p320 = pneg %p134
        $region26: #{tpu_custom_call.1} parent=11 // pred_check_branch
          %322 = sbr.rel (%p320) target = $region28
        $region27: #{tpu_custom_call.1} parent=11 // pred_region
          _
        $region28: #{tpu_custom_call.1} parent=11 // pred_fallthru
          _
        // Predicated region
        $region29: #{tpu_custom_call.1} parent=11 // pred_check
          %p323 = pneg %p155
        $region30: #{tpu_custom_call.1} parent=11 // pred_check_branch
          %325 = sbr.rel (%p323) target = $region32
        $region31: #{tpu_custom_call.1} parent=11 // pred_region
          _
        $region32: #{tpu_custom_call.1} parent=11 // pred_fallthru
          _
        // Predicated region
        $region33: #{tpu_custom_call.1} parent=11 // pred_check
          %p326 = pneg %p176
        $region34: #{tpu_custom_call.1} parent=11 // pred_check_branch
          %328 = sbr.rel (%p326) target = $region36
        $region35: #{tpu_custom_call.1} parent=11 // pred_region
          _
        $region36: #{tpu_custom_call.1} parent=11 // pred_fallthru
          _
        // Predicated region
        $region37: #{tpu_custom_call.1} parent=11 // pred_check
          %p329 = pneg %p197
        $region38: #{tpu_custom_call.1} parent=11 // pred_check_branch
          %331 = sbr.rel (%p329) target = $region40
        $region39: #{tpu_custom_call.1} parent=11 // pred_region
          _
        $region40: #{tpu_custom_call.1} parent=11 // pred_fallthru
          _
        // Predicated region
        $region41: #{tpu_custom_call.1} parent=11 // pred_check
          %p332 = pneg %p218
        $region42: #{tpu_custom_call.1} parent=11 // pred_check_branch
          %334 = sbr.rel (%p332) target = $region44
        $region43: #{tpu_custom_call.1} parent=11 // pred_region
          _
        $region44: #{tpu_custom_call.1} parent=11 // pred_fallthru
          _
        // Predicated region
        $region45: #{tpu_custom_call.1} parent=11 // pred_check
          %p335 = pneg %p239
        $region46: #{tpu_custom_call.1} parent=11 // pred_check_branch
          %337 = sbr.rel (%p335) target = $region48
        $region47: #{tpu_custom_call.1} parent=11 // pred_region
          _
        $region48: #{tpu_custom_call.1} parent=11 // pred_fallthru
          _
        // Predicated region
        $region49: #{tpu_custom_call.1} parent=11 // pred_check
          %p338 = pneg %p260
        $region50: #{tpu_custom_call.1} parent=11 // pred_check_branch
          %340 = sbr.rel (%p338) target = $region52
        $region51: #{tpu_custom_call.1} parent=11 // pred_region
          _
        $region52: #{tpu_custom_call.1} parent=11 // pred_fallthru
          _
      $region12: #{tpu_custom_call.1} parent=5 // pred_fallthru
        _
      %p341 = scmp.lt.s32.totalorder %s24, 2
      // Predicated region
      $region53: #{tpu_custom_call.1} parent=5 // pred_check
        %p342 = pneg %p341
      $region54: #{tpu_custom_call.1} parent=5 // pred_check_branch
        %344 = sbr.rel (%p342) target = $region56
      $region55: #{tpu_custom_call.1} parent=5 // pred_region
        // Predicated region
        $region57: #{tpu_custom_call.1} parent=55 // pred_check
          %p345 = pneg %p44
        $region58: #{tpu_custom_call.1} parent=55 // pred_check_branch
          %347 = sbr.rel (%p345) target = $region60
        $region59: #{tpu_custom_call.1} parent=55 // pred_region
          %s348 = sand.u32 %s34, 1
          %s349 = scalar_lea.sflag [#allocation3], %s348
          %s350 = sand.u32 %s34, 1
          %s351 = smul.addr %s350, 8
          %s352 = scalar_lea.vmem [#allocation2], %s351
          %s354 = ssub.s32 128, 128
          %355 = vsyncadd %s349, %s354
          %s356 = smul.addr %s24, 128
          %s357 = scalar_lea.hbm %s0, %s356
          %s359 = sshll.u32 %s352, 4
          %s360 = int_to_ptr.vmem [resolvable:$true] %s359
          %362 = dma.hbm_to_vmem [thread:$0]  %s357, 128, %s360, %s349
        $region60: #{tpu_custom_call.1} parent=55 // pred_fallthru
          _
      $region56: #{tpu_custom_call.1} parent=5 // pred_fallthru
        _
      %p363 = scmp.le.s32.totalorder 1, %s24
      %p364 = scmp.lt.s32.totalorder %s24, 3
      %p365 = pnand %p363, %p364
      %p366 = pneg %p365
      // Predicated region
      $region61: #{tpu_custom_call.1} parent=5 // pred_check
        _
      $region62: #{tpu_custom_call.1} parent=5 // pred_check_branch
        %368 = sbr.rel (%p365) target = $region64
      $region63: #{tpu_custom_call.1} parent=5 // pred_region
        %s369 = ssub.s32 %s24, 1
        %s370 = sand.u32 %s37, 1
        %s371 = scalar_lea.sflag [#allocation3], %s370
        %s372 = sand.u32 %s37, 1
        %s373 = smul.addr %s372, 8
        %s374 = scalar_lea.vmem [#allocation2], %s373
        // Predicated region
        $region65: #{tpu_custom_call.1} parent=63 // pred_check
          %p375 = pneg %p50
        $region66: #{tpu_custom_call.1} parent=63 // pred_check_branch
          %377 = sbr.rel (%p375) target = $region68
        $region67: #{tpu_custom_call.1} parent=63 // pred_region
          %378 = dma.done %s371, 128
        $region68: #{tpu_custom_call.1} parent=63 // pred_fallthru
          _
        // Predicated region
        $region69: #{tpu_custom_call.1} parent=63 // pred_check
          %p379 = pneg %p71
        $region70: #{tpu_custom_call.1} parent=63 // pred_check_branch
          %381 = sbr.rel (%p379) target = $region72
        $region71: #{tpu_custom_call.1} parent=63 // pred_region
          %382 = dma.done [#allocation6], 1024
        $region72: #{tpu_custom_call.1} parent=63 // pred_fallthru
          _
        %s383 = sand.u32 %s37, 1
        %s384 = scalar_lea.sflag [#allocation3], %s383
        %s385 = sand.u32 %s37, 1
        %s386 = smul.addr %s385, 8
        %s387 = scalar_lea.vmem [#allocation2], %s386
        %p388 = pneg %p50
        %p389 = pneg %p47
        %p390 = pneg %p71
        %p391 = pneg %p68
        %p392 = pneg %p92
        %p393 = pneg %p89
        %p394 = pneg %p113
        %p395 = pneg %p110
        %p396 = pneg %p134
        %p397 = pneg %p131
        %p398 = pneg %p155
        %p399 = pneg %p152
        %p400 = pneg %p176
        %p401 = pneg %p173
        %p402 = pneg %p197
        %p403 = pneg %p194
        %p404 = pneg %p218
        %p405 = pneg %p215
        %p406 = pneg %p239
        %p407 = pneg %p236
        %p408 = pneg %p260
        %p409 = pneg %p257
        %p410 = pneg %p286
        %p411 = pneg %p283
        %s412 = sand.u32 %s273, 1
        %s413 = scalar_lea.sflag [#allocation4], %s412
        %s414 = sand.u32 %s273, 1
        %s415 = smul.addr %s414, 8
        %s416 = scalar_lea.vmem [#allocation7], %s415
        %v417 = vld [vmem:[%s374] sm:$0xff]
        %v418 = vld [vmem:[#allocation5] sm:$0xff]
        %v419 = vld [vmem:[#allocation5 + $0x8] sm:$0xff]
        %v420 = vld [vmem:[#allocation5 + $0x10] sm:$0xff]
        %v421 = vld [vmem:[#allocation5 + $0x18] sm:$0xff]
        %v422 = vld [vmem:[#allocation5 + $0x20] sm:$0xff]
        %v423 = vld [vmem:[#allocation5 + $0x28] sm:$0xff]
        %v424 = vld [vmem:[#allocation5 + $0x30] sm:$0xff]
        %v425 = vld [vmem:[#allocation5 + $0x38] sm:$0xff]
        %v426 = vld [vmem:[%s2] sm:$0x3]
        %v428 = vlaneseq
        %v429 = vshrl.u32 %v428, 7
        %v430 = vsub.s32 0, %v429
        %v431 = vrot.slane %v426, %v430
        %v432 = vlaneseq
        %v433 = vshrl.u32 %v432, 7
        %v434 = vsub.s32 1, %v433
        %v435 = vrot.slane %v426, %v434
        %vm438 = vcmask 261120
        %v440 = vsel %vm438, %v417, 0
        %442 = vmatprep.subr.mxu0 0.0
        %443 = vmatpush1.msra.mxu0 0.0
        %444 = vmatprep.subr.mxu0 0.0
        %445 = vmatpush1.msra.mxu0 0.0
        %446 = vmatprep.subr.mxu0 0.0
        %447 = vmatpush1.msra.mxu0 0.0
        %448 = vmatprep.subr.mxu0 0.0
        %449 = vmatpush1.msra.mxu0 0.0
        %450 = vmatprep.subr.mxu0 0.0
        %451 = vmatpush1.msra.mxu0 0.0
        %452 = vmatprep.subr.mxu0 0.0
        %453 = vmatpush1.msra.mxu0 0.0
        %454 = vmatprep.subr.mxu0 0.0
        %455 = vmatpush1.msra.mxu0 0.0
        %456 = vmatprep.subr.mxu0 0.0
        %457 = vmatpush1.msra.mxu0 0.0
        %458 = vmatprep.subr.mxu0 0.0
        %459 = vmatpush1.msra.mxu0 0.0
        %460 = vmatprep.subr.mxu0 0.0
        %461 = vmatpush1.msra.mxu0 0.0
        %462 = vmatprep.subr.mxu0 0.0
        %463 = vmatpush1.msra.mxu0 0.0
        %464 = vmatprep.subr.mxu0 0.0
        %465 = vmatpush1.msra.mxu0 0.0
        %466 = vmatprep.subr.mxu0 %v425
        %467 = vmatpush1.msra.mxu0 %v424
        %468 = vmatprep.subr.mxu0 %v423
        %469 = vmatpush1.msra.mxu0 %v422
        %470 = vmatprep.subr.mxu0 %v421
        %471 = vmatpush1.msra.mxu0 %v420
        %472 = vmatprep.subr.mxu0 %v419
        %473 = vmatpush1.msra.mxu0 %v418
        %474 = vmatprep.subr.mxu0 0.0
        %475 = vmatpush2.msra.mxu0 0.0
        %476 = vmatprep.subr.mxu0 0.0
        %477 = vmatpush2.msra.mxu0 0.0
        %478 = vmatprep.subr.mxu0 0.0
        %479 = vmatpush2.msra.mxu0 0.0
        %480 = vmatprep.subr.mxu0 0.0
        %481 = vmatpush2.msra.mxu0 0.0
        %482 = vmatprep.subr.mxu0 0.0
        %483 = vmatpush2.msra.mxu0 0.0
        %484 = vmatprep.subr.mxu0 0.0
        %485 = vmatpush2.msra.mxu0 0.0
        %486 = vmatprep.subr.mxu0 0.0
        %487 = vmatpush2.msra.mxu0 0.0
        %488 = vmatprep.subr.mxu0 0.0
        %489 = vmatpush2.msra.mxu0 0.0
        %490 = vmatprep.subr.mxu0 0.0
        %491 = vmatpush2.msra.mxu0 0.0
        %492 = vmatprep.subr.mxu0 0.0
        %493 = vmatpush2.msra.mxu0 0.0
        %494 = vmatprep.subr.mxu0 0.0
        %495 = vmatpush2.msra.mxu0 0.0
        %496 = vmatprep.subr.mxu0 0.0
        %497 = vmatpush2.msra.mxu0 0.0
        %498 = vmatprep.subr.mxu0 0.0
        %499 = vmatpush2.msra.mxu0 0.0
        %500 = vmatprep.subr.mxu0 0.0
        %501 = vmatpush2.msra.mxu0 0.0
        %502 = vmatprep.subr.mxu0 0.0
        %503 = vmatpush2.msra.mxu0 0.0
        %504 = vmatprep.subr.mxu0 0.0
        %505 = vmatpush2.msra.mxu0 0.0
        %506 = vmatprep.mubr.f32.mxu0 0.0
        %507 = vmatmul.mubr.f32.gmra.mxu0 %v440
        %v508 = vpop.f32.mrf.mxu0
        %v509 = vadd.f32 %v431, %v508
        %v510 = vpop.f32.mrf.mxu0
        %v511 = vadd.f32 %v435, %v510
        %512 = vdwg.mxu0
        %v513 = vmul.f32 %v509, 0.5
        %v514 = vmul.f32 %v511, 0.5
        %v515 = vmul.f32 %v509, 0.70710677
        %v516 = vmul.f32 %v511, 0.70710677
        %v517 = vand.u32 2147483647, %v515
        %v518 = vand.u32 2147483647, %v516
        %v519 = vmul.f32 %v517, 0.3275911
        %v520 = vmul.f32 %v518, 0.3275911
        %v521 = vadd.f32 %v519, 1.0
        %v522 = vadd.f32 %v520, 1.0
        %v523 = vrcp.pop %v521
        %v524 = vmul.f32 1.0, %v523
        %v525 = vrcp.pop %v522
        %v526 = vmul.f32 1.0, %v525
        %v527 = vmul.f32 %v524, 1.0614054
        %v528 = vmul.f32 %v526, 1.0614054
        %v529 = vadd.f32 %v527, -1.4531521
        %v530 = vadd.f32 %v528, -1.4531521
        %v531 = vmul.f32 %v529, %v524
        %v532 = vmul.f32 %v530, %v526
        %v533 = vadd.f32 %v531, 1.4214138
        %v534 = vadd.f32 %v532, 1.4214138
        %v535 = vmul.f32 %v533, %v524
        %v536 = vmul.f32 %v534, %v526
        %v537 = vadd.f32 %v535, -0.28449672
        %v538 = vadd.f32 %v536, -0.28449672
        %v539 = vmul.f32 %v537, %v524
        %v540 = vmul.f32 %v538, %v526
        %v541 = vadd.f32 %v539, 0.2548296
        %v542 = vadd.f32 %v540, 0.2548296
        %v543 = vmul.f32 %v541, %v524
        %v544 = vmul.f32 %v542, %v526
        %v545 = vsub.f32 0.0, %v517
        %v546 = vsub.f32 0.0, %v518
        %v547 = vmul.f32 %v545, %v517
        %v548 = vmul.f32 %v546, %v518
        %v549 = vmul.f32 %v547, 1.442695
        %v550 = vpow.pop %v549
        %v551 = vmul.f32 %v548, 1.442695
        %v552 = vpow.pop %v551
        %v553 = vmul.f32 %v543, %v550
        %v554 = vmul.f32 %v544, %v552
        %v555 = vsub.f32 1.0, %v553
        %v556 = vsub.f32 1.0, %v554
        %vm557 = vcmp.lt.f32.partialorder %v515, 0.0
        %vm558 = vcmp.lt.f32.partialorder %v516, 0.0
        %v559 = vsub.f32 0.0, %v555
        %v560 = vsub.f32 0.0, %v556
        %v561 = vsel %vm557, %v559, %v555
        %v562 = vsel %vm558, %v560, %v556
        %v563 = vadd.f32 %v561, 1.0
        %v564 = vadd.f32 %v562, 1.0
        %v565 = vmul.f32 %v513, %v563
        %v566 = vmul.f32 %v514, %v564
        %v567 = vld [vmem:[%s3] sm:$0xff]
        %v568 = vld [vmem:[%s3 + $0x8] sm:$0xff]
        %v569 = vld [vmem:[%s3 + $0x10] sm:$0xff]
        %v570 = vld [vmem:[%s3 + $0x18] sm:$0xff]
        %v571 = vld [vmem:[%s3 + $0x20] sm:$0xff]
        %v572 = vld [vmem:[%s3 + $0x28] sm:$0xff]
        %v573 = vld [vmem:[%s3 + $0x30] sm:$0xff]
        %v574 = vld [vmem:[%s3 + $0x38] sm:$0xff]
        %v575 = vld [vmem:[%s3 + $0x40] sm:$0xff]
        %v576 = vld [vmem:[%s3 + $0x48] sm:$0xff]
        %v577 = vld [vmem:[%s3 + $0x50] sm:$0xff]
        %v578 = vld [vmem:[%s3 + $0x58] sm:$0xff]
        %v579 = vld [vmem:[%s3 + $0x60] sm:$0xff]
        %v580 = vld [vmem:[%s3 + $0x68] sm:$0xff]
        %v581 = vld [vmem:[%s3 + $0x70] sm:$0xff]
        %v582 = vld [vmem:[%s3 + $0x78] sm:$0xff]
        %v583 = vld [vmem:[%s3 + $0x80] sm:$0xff]
        %v584 = vld [vmem:[%s3 + $0x88] sm:$0xff]
        %v585 = vld [vmem:[%s3 + $0x90] sm:$0xff]
        %v586 = vld [vmem:[%s3 + $0x98] sm:$0xff]
        %v587 = vld [vmem:[%s3 + $0xa0] sm:$0xff]
        %v588 = vld [vmem:[%s3 + $0xa8] sm:$0xff]
        %v589 = vld [vmem:[%s3 + $0xb0] sm:$0xff]
        %v590 = vld [vmem:[%s3 + $0xb8] sm:$0xff]
        %v591 = vld [vmem:[%s3 + $0xc0] sm:$0xff]
        %v592 = vld [vmem:[%s3 + $0xc8] sm:$0xff]
        %v593 = vld [vmem:[%s3 + $0xd0] sm:$0xff]
        %v594 = vld [vmem:[%s3 + $0xd8] sm:$0xff]
        %v595 = vld [vmem:[%s3 + $0xe0] sm:$0xff]
        %v596 = vld [vmem:[%s3 + $0xe8] sm:$0xff]
        %v597 = vld [vmem:[%s3 + $0xf0] sm:$0xff]
        %v598 = vld [vmem:[%s3 + $0xf8] sm:$0xff]
        %v599 = vld [vmem:[%s4] sm:$0x1]
        %v601 = vlaneseq
        %v602 = vshrl.u32 %v601, 7
        %v603 = vsub.s32 0, %v602
        %v604 = vrot.slane %v599, %v603
        %606 = vmatprep.subr.mxu0 0.0
        %607 = vmatpush1.msra.mxu0 %v582
        %608 = vmatprep.subr.mxu0 0.0
        %609 = vmatpush1.msra.mxu0 %v581
        %610 = vmatprep.subr.mxu0 0.0
        %611 = vmatpush1.msra.mxu0 %v580
        %612 = vmatprep.subr.mxu0 0.0
        %613 = vmatpush1.msra.mxu0 %v579
        %614 = vmatprep.subr.mxu0 0.0
        %615 = vmatpush1.msra.mxu0 %v578
        %616 = vmatprep.subr.mxu0 0.0
        %617 = vmatpush1.msra.mxu0 %v577
        %618 = vmatprep.subr.mxu0 0.0
        %619 = vmatpush1.msra.mxu0 %v576
        %620 = vmatprep.subr.mxu0 0.0
        %621 = vmatpush1.msra.mxu0 %v575
        %622 = vmatprep.subr.mxu0 0.0
        %623 = vmatpush1.msra.mxu0 %v574
        %624 = vmatprep.subr.mxu0 0.0
        %625 = vmatpush1.msra.mxu0 %v573
        %626 = vmatprep.subr.mxu0 0.0
        %627 = vmatpush1.msra.mxu0 %v572
        %628 = vmatprep.subr.mxu0 0.0
        %629 = vmatpush1.msra.mxu0 %v571
        %630 = vmatprep.subr.mxu0 0.0
        %631 = vmatpush1.msra.mxu0 %v570
        %632 = vmatprep.subr.mxu0 0.0
        %633 = vmatpush1.msra.mxu0 %v569
        %634 = vmatprep.subr.mxu0 0.0
        %635 = vmatpush1.msra.mxu0 %v568
        %636 = vmatprep.subr.mxu0 0.0
        %637 = vmatpush1.msra.mxu0 %v567
        %638 = vmatprep.subr.mxu0 0.0
        %639 = vmatpush2.msra.mxu0 %v598
        %640 = vmatprep.subr.mxu0 0.0
        %641 = vmatpush2.msra.mxu0 %v597
        %642 = vmatprep.subr.mxu0 0.0
        %643 = vmatpush2.msra.mxu0 %v596
        %644 = vmatprep.subr.mxu0 0.0
        %645 = vmatpush2.msra.mxu0 %v595
        %646 = vmatprep.subr.mxu0 0.0
        %647 = vmatpush2.msra.mxu0 %v594
        %648 = vmatprep.subr.mxu0 0.0
        %649 = vmatpush2.msra.mxu0 %v593
        %650 = vmatprep.subr.mxu0 0.0
        %651 = vmatpush2.msra.mxu0 %v592
        %652 = vmatprep.subr.mxu0 0.0
        %653 = vmatpush2.msra.mxu0 %v591
        %654 = vmatprep.subr.mxu0 0.0
        %655 = vmatpush2.msra.mxu0 %v590
        %656 = vmatprep.subr.mxu0 0.0
        %657 = vmatpush2.msra.mxu0 %v589
        %658 = vmatprep.subr.mxu0 0.0
        %659 = vmatpush2.msra.mxu0 %v588
        %660 = vmatprep.subr.mxu0 0.0
        %661 = vmatpush2.msra.mxu0 %v587
        %662 = vmatprep.subr.mxu0 0.0
        %663 = vmatpush2.msra.mxu0 %v586
        %664 = vmatprep.subr.mxu0 0.0
        %665 = vmatpush2.msra.mxu0 %v585
        %666 = vmatprep.subr.mxu0 0.0
        %667 = vmatpush2.msra.mxu0 %v584
        %668 = vmatprep.subr.mxu0 0.0
        %669 = vmatpush2.msra.mxu0 %v583
        %670 = vmatprep.mubr.f32.mxu0 %v566
        %671 = vmatmul.mubr.f32.gmra.mxu0 %v565
        %v672 = vpop.f32.mrf.mxu0
        %v673 = vadd.f32 %v604, %v672
        %v674 = vpop.f32.mrf.mxu0
        %675 = vdwg.mxu0
        %v676 = vmul.f32 %v673, 0.5
        %v677 = vmul.f32 %v673, 0.70710677
        %v678 = vand.u32 2147483647, %v677
        %v679 = vmul.f32 %v678, 0.3275911
        %v680 = vadd.f32 %v679, 1.0
        %v681 = vrcp.pop %v680
        %v682 = vmul.f32 1.0, %v681
        %v683 = vmul.f32 %v682, 1.0614054
        %v684 = vadd.f32 %v683, -1.4531521
        %v685 = vmul.f32 %v684, %v682
        %v686 = vadd.f32 %v685, 1.4214138
        %v687 = vmul.f32 %v686, %v682
        %v688 = vadd.f32 %v687, -0.28449672
        %v689 = vmul.f32 %v688, %v682
        %v690 = vadd.f32 %v689, 0.2548296
        %v691 = vmul.f32 %v690, %v682
        %v692 = vsub.f32 0.0, %v678
        %v693 = vmul.f32 %v692, %v678
        %v694 = vmul.f32 %v693, 1.442695
        %v695 = vpow.pop %v694
        %v696 = vmul.f32 %v691, %v695
        %v697 = vsub.f32 1.0, %v696
        %vm698 = vcmp.lt.f32.partialorder %v677, 0.0
        %v699 = vsub.f32 0.0, %v697
        %v700 = vsel %vm698, %v699, %v697
        %v701 = vadd.f32 %v700, 1.0
        %v702 = vmul.f32 %v676, %v701
        %v703 = vld [vmem:[%s5] sm:$0xff]
        %v704 = vld [vmem:[%s5 + $0x8] sm:$0xff]
        %v705 = vld [vmem:[%s5 + $0x10] sm:$0xff]
        %v706 = vld [vmem:[%s5 + $0x18] sm:$0xff]
        %v707 = vld [vmem:[%s5 + $0x20] sm:$0xff]
        %v708 = vld [vmem:[%s5 + $0x28] sm:$0xff]
        %v709 = vld [vmem:[%s5 + $0x30] sm:$0xff]
        %v710 = vld [vmem:[%s5 + $0x38] sm:$0xff]
        %v711 = vld [vmem:[%s5 + $0x40] sm:$0xff]
        %v712 = vld [vmem:[%s5 + $0x48] sm:$0xff]
        %v713 = vld [vmem:[%s5 + $0x50] sm:$0xff]
        %v714 = vld [vmem:[%s5 + $0x58] sm:$0xff]
        %v715 = vld [vmem:[%s5 + $0x60] sm:$0xff]
        %v716 = vld [vmem:[%s5 + $0x68] sm:$0xff]
        %v717 = vld [vmem:[%s5 + $0x70] sm:$0xff]
        %v718 = vld [vmem:[%s5 + $0x78] sm:$0xff]
        %v719 = vld [vmem:[%s6] sm:$0x1]
        %v721 = vlaneseq
        %v722 = vshrl.u32 %v721, 7
        %v723 = vsub.s32 0, %v722
        %v724 = vrot.slane %v719, %v723
        %726 = vmatprep.subr.mxu0 0.0
        %727 = vmatpush1.msra.mxu0 %v718
        %728 = vmatprep.subr.mxu0 0.0
        %729 = vmatpush1.msra.mxu0 %v717
        %730 = vmatprep.subr.mxu0 0.0
        %731 = vmatpush1.msra.mxu0 %v716
        %732 = vmatprep.subr.mxu0 0.0
        %733 = vmatpush1.msra.mxu0 %v715
        %734 = vmatprep.subr.mxu0 0.0
        %735 = vmatpush1.msra.mxu0 %v714
        %736 = vmatprep.subr.mxu0 0.0
        %737 = vmatpush1.msra.mxu0 %v713
        %738 = vmatprep.subr.mxu0 0.0
        %739 = vmatpush1.msra.mxu0 %v712
        %740 = vmatprep.subr.mxu0 0.0
        %741 = vmatpush1.msra.mxu0 %v711
        %742 = vmatprep.subr.mxu0 0.0
        %743 = vmatpush1.msra.mxu0 %v710
        %744 = vmatprep.subr.mxu0 0.0
        %745 = vmatpush1.msra.mxu0 %v709
        %746 = vmatprep.subr.mxu0 0.0
        %747 = vmatpush1.msra.mxu0 %v708
        %748 = vmatprep.subr.mxu0 0.0
        %749 = vmatpush1.msra.mxu0 %v707
        %750 = vmatprep.subr.mxu0 0.0
        %751 = vmatpush1.msra.mxu0 %v706
        %752 = vmatprep.subr.mxu0 0.0
        %753 = vmatpush1.msra.mxu0 %v705
        %754 = vmatprep.subr.mxu0 0.0
        %755 = vmatpush1.msra.mxu0 %v704
        %756 = vmatprep.subr.mxu0 0.0
        %757 = vmatpush1.msra.mxu0 %v703
        %758 = vmatprep.subr.mxu0 0.0
        %759 = vmatpush2.msra.mxu0 0.0
        %760 = vmatprep.subr.mxu0 0.0
        %761 = vmatpush2.msra.mxu0 0.0
        %762 = vmatprep.subr.mxu0 0.0
        %763 = vmatpush2.msra.mxu0 0.0
        %764 = vmatprep.subr.mxu0 0.0
        %765 = vmatpush2.msra.mxu0 0.0
        %766 = vmatprep.subr.mxu0 0.0
        %767 = vmatpush2.msra.mxu0 0.0
        %768 = vmatprep.subr.mxu0 0.0
        %769 = vmatpush2.msra.mxu0 0.0
        %770 = vmatprep.subr.mxu0 0.0
        %771 = vmatpush2.msra.mxu0 0.0
        %772 = vmatprep.subr.mxu0 0.0
        %773 = vmatpush2.msra.mxu0 0.0
        %774 = vmatprep.subr.mxu0 0.0
        %775 = vmatpush2.msra.mxu0 0.0
        %776 = vmatprep.subr.mxu0 0.0
        %777 = vmatpush2.msra.mxu0 0.0
        %778 = vmatprep.subr.mxu0 0.0
        %779 = vmatpush2.msra.mxu0 0.0
        %780 = vmatprep.subr.mxu0 0.0
        %781 = vmatpush2.msra.mxu0 0.0
        %782 = vmatprep.subr.mxu0 0.0
        %783 = vmatpush2.msra.mxu0 0.0
        %784 = vmatprep.subr.mxu0 0.0
        %785 = vmatpush2.msra.mxu0 0.0
        %786 = vmatprep.subr.mxu0 0.0
        %787 = vmatpush2.msra.mxu0 0.0
        %788 = vmatprep.subr.mxu0 0.0
        %789 = vmatpush2.msra.mxu0 0.0
        %790 = vmatprep.mubr.f32.mxu0 0.0
        %791 = vmatmul.mubr.f32.gmra.mxu0 %v702
        %v792 = vpop.f32.mrf.mxu0
        %v793 = vadd.f32 %v724, %v792
        %v794 = vpop.f32.mrf.mxu0
        %795 = vdwg.mxu0
        %v796 = vmul.f32 %v793, 0.5
        %v797 = vmul.f32 %v793, 0.70710677
        %v798 = vand.u32 2147483647, %v797
        %v799 = vmul.f32 %v798, 0.3275911
        %v800 = vadd.f32 %v799, 1.0
        %v801 = vrcp.pop %v800
        %v802 = vmul.f32 1.0, %v801
        %v803 = vmul.f32 %v802, 1.0614054
        %v804 = vadd.f32 %v803, -1.4531521
        %v805 = vmul.f32 %v804, %v802
        %v806 = vadd.f32 %v805, 1.4214138
        %v807 = vmul.f32 %v806, %v802
        %v808 = vadd.f32 %v807, -0.28449672
        %v809 = vmul.f32 %v808, %v802
        %v810 = vadd.f32 %v809, 0.2548296
        %v811 = vmul.f32 %v810, %v802
        %v812 = vsub.f32 0.0, %v798
        %v813 = vmul.f32 %v812, %v798
        %v814 = vmul.f32 %v813, 1.442695
        %v815 = vpow.pop %v814
        %v816 = vmul.f32 %v811, %v815
        %v817 = vsub.f32 1.0, %v816
        %vm818 = vcmp.lt.f32.partialorder %v797, 0.0
        %v819 = vsub.f32 0.0, %v817
        %v820 = vsel %vm818, %v819, %v817
        %v821 = vadd.f32 %v820, 1.0
        %v822 = vmul.f32 %v796, %v821
        %v823 = vld [vmem:[%s7] sm:$0xff]
        %v824 = vld [vmem:[%s7 + $0x8] sm:$0xff]
        %v825 = vld [vmem:[%s7 + $0x10] sm:$0xff]
        %v826 = vld [vmem:[%s7 + $0x18] sm:$0xff]
        %v827 = vld [vmem:[%s7 + $0x20] sm:$0xff]
        %v828 = vld [vmem:[%s7 + $0x28] sm:$0xff]
        %v829 = vld [vmem:[%s7 + $0x30] sm:$0xff]
        %v830 = vld [vmem:[%s7 + $0x38] sm:$0xff]
        %v831 = vld [vmem:[%s8] sm:$0x1]
        %v833 = vlaneseq
        %v834 = vshrl.u32 %v833, 7
        %v835 = vsub.s32 0, %v834
        %v836 = vrot.slane %v831, %v835
        %vm838 = vcmask 523264
        %v840 = vsel %vm838, %v822, 0
        %842 = vmatprep.subr.mxu0 0.0
        %843 = vmatpush1.msra.mxu0 0.0
        %844 = vmatprep.subr.mxu0 0.0
        %845 = vmatpush1.msra.mxu0 0.0
        %846 = vmatprep.subr.mxu0 0.0
        %847 = vmatpush1.msra.mxu0 0.0
        %848 = vmatprep.subr.mxu0 0.0
        %849 = vmatpush1.msra.mxu0 0.0
        %850 = vmatprep.subr.mxu0 0.0
        %851 = vmatpush1.msra.mxu0 0.0
        %852 = vmatprep.subr.mxu0 0.0
        %853 = vmatpush1.msra.mxu0 0.0
        %854 = vmatprep.subr.mxu0 0.0
        %855 = vmatpush1.msra.mxu0 0.0
        %856 = vmatprep.subr.mxu0 0.0
        %857 = vmatpush1.msra.mxu0 0.0
        %858 = vmatprep.subr.mxu0 0.0
        %859 = vmatpush1.msra.mxu0 %v830
        %860 = vmatprep.subr.mxu0 0.0
        %861 = vmatpush1.msra.mxu0 %v829
        %862 = vmatprep.subr.mxu0 0.0
        %863 = vmatpush1.msra.mxu0 %v828
        %864 = vmatprep.subr.mxu0 0.0
        %865 = vmatpush1.msra.mxu0 %v827
        %866 = vmatprep.subr.mxu0 0.0
        %867 = vmatpush1.msra.mxu0 %v826
        %868 = vmatprep.subr.mxu0 0.0
        %869 = vmatpush1.msra.mxu0 %v825
        %870 = vmatprep.subr.mxu0 0.0
        %871 = vmatpush1.msra.mxu0 %v824
        %872 = vmatprep.subr.mxu0 0.0
        %873 = vmatpush1.msra.mxu0 %v823
        %874 = vmatprep.subr.mxu0 0.0
        %875 = vmatpush2.msra.mxu0 0.0
        %876 = vmatprep.subr.mxu0 0.0
        %877 = vmatpush2.msra.mxu0 0.0
        %878 = vmatprep.subr.mxu0 0.0
        %879 = vmatpush2.msra.mxu0 0.0
        %880 = vmatprep.subr.mxu0 0.0
        %881 = vmatpush2.msra.mxu0 0.0
        %882 = vmatprep.subr.mxu0 0.0
        %883 = vmatpush2.msra.mxu0 0.0
        %884 = vmatprep.subr.mxu0 0.0
        %885 = vmatpush2.msra.mxu0 0.0
        %886 = vmatprep.subr.mxu0 0.0
        %887 = vmatpush2.msra.mxu0 0.0
        %888 = vmatprep.subr.mxu0 0.0
        %889 = vmatpush2.msra.mxu0 0.0
        %890 = vmatprep.subr.mxu0 0.0
        %891 = vmatpush2.msra.mxu0 0.0
        %892 = vmatprep.subr.mxu0 0.0
        %893 = vmatpush2.msra.mxu0 0.0
        %894 = vmatprep.subr.mxu0 0.0
        %895 = vmatpush2.msra.mxu0 0.0
        %896 = vmatprep.subr.mxu0 0.0
        %897 = vmatpush2.msra.mxu0 0.0
        %898 = vmatprep.subr.mxu0 0.0
        %899 = vmatpush2.msra.mxu0 0.0
        %900 = vmatprep.subr.mxu0 0.0
        %901 = vmatpush2.msra.mxu0 0.0
        %902 = vmatprep.subr.mxu0 0.0
        %903 = vmatpush2.msra.mxu0 0.0
        %904 = vmatprep.subr.mxu0 0.0
        %905 = vmatpush2.msra.mxu0 0.0
        %906 = vmatprep.mubr.f32.mxu0 0.0
        %907 = vmatmul.mubr.f32.gmra.mxu0 %v840
        %v908 = vpop.f32.mrf.mxu0
        %v909 = vadd.f32 %v836, %v908
        %v910 = vpop.f32.mrf.mxu0
        %911 = vdwg.mxu0
        %v912 = vmul.f32 %v909, 0.5
        %v913 = vmul.f32 %v909, 0.70710677
        %v914 = vand.u32 2147483647, %v913
        %v915 = vmul.f32 %v914, 0.3275911
        %v916 = vadd.f32 %v915, 1.0
        %v917 = vrcp.pop %v916
        %v918 = vmul.f32 1.0, %v917
        %v919 = vmul.f32 %v918, 1.0614054
        %v920 = vadd.f32 %v919, -1.4531521
        %v921 = vmul.f32 %v920, %v918
        %v922 = vadd.f32 %v921, 1.4214138
        %v923 = vmul.f32 %v922, %v918
        %v924 = vadd.f32 %v923, -0.28449672
        %v925 = vmul.f32 %v924, %v918
        %v926 = vadd.f32 %v925, 0.2548296
        %v927 = vmul.f32 %v926, %v918
        %v928 = vsub.f32 0.0, %v914
        %v929 = vmul.f32 %v928, %v914
        %v930 = vmul.f32 %v929, 1.442695
        %v931 = vpow.pop %v930
        %v932 = vmul.f32 %v927, %v931
        %v933 = vsub.f32 1.0, %v932
        %vm934 = vcmp.lt.f32.partialorder %v913, 0.0
        %v935 = vsub.f32 0.0, %v933
        %v936 = vsel %vm934, %v935, %v933
        %v937 = vadd.f32 %v936, 1.0
        %v938 = vmul.f32 %v912, %v937
        %v939 = vld [vmem:[%s9] sm:$0xff]
        %v940 = vld [vmem:[%s9 + $0x8] sm:$0xff]
        %v941 = vld [vmem:[%s9 + $0x10] sm:$0xff]
        %v942 = vld [vmem:[%s9 + $0x18] sm:$0xff]
        %v943 = vld [vmem:[%s10] sm:$0x1]
        %v945 = vlaneseq
        %v946 = vshrl.u32 %v945, 7
        %v947 = vsub.s32 0, %v946
        %v948 = vrot.slane %v943, %v947
        %v951 = vsel %vm438, %v938, 0
        %953 = vmatprep.subr.mxu0 0.0
        %954 = vmatpush1.msra.mxu0 0.0
        %955 = vmatprep.subr.mxu0 0.0
        %956 = vmatpush1.msra.mxu0 0.0
        %957 = vmatprep.subr.mxu0 0.0
        %958 = vmatpush1.msra.mxu0 0.0
        %959 = vmatprep.subr.mxu0 0.0
        %960 = vmatpush1.msra.mxu0 0.0
        %961 = vmatprep.subr.mxu0 0.0
        %962 = vmatpush1.msra.mxu0 0.0
        %963 = vmatprep.subr.mxu0 0.0
        %964 = vmatpush1.msra.mxu0 0.0
        %965 = vmatprep.subr.mxu0 0.0
        %966 = vmatpush1.msra.mxu0 0.0
        %967 = vmatprep.subr.mxu0 0.0
        %968 = vmatpush1.msra.mxu0 0.0
        %969 = vmatprep.subr.mxu0 0.0
        %970 = vmatpush1.msra.mxu0 0.0
        %971 = vmatprep.subr.mxu0 0.0
        %972 = vmatpush1.msra.mxu0 0.0
        %973 = vmatprep.subr.mxu0 0.0
        %974 = vmatpush1.msra.mxu0 0.0
        %975 = vmatprep.subr.mxu0 0.0
        %976 = vmatpush1.msra.mxu0 0.0
        %977 = vmatprep.subr.mxu0 0.0
        %978 = vmatpush1.msra.mxu0 %v942
        %979 = vmatprep.subr.mxu0 0.0
        %980 = vmatpush1.msra.mxu0 %v941
        %981 = vmatprep.subr.mxu0 0.0
        %982 = vmatpush1.msra.mxu0 %v940
        %983 = vmatprep.subr.mxu0 0.0
        %984 = vmatpush1.msra.mxu0 %v939
        %985 = vmatprep.subr.mxu0 0.0
        %986 = vmatpush2.msra.mxu0 0.0
        %987 = vmatprep.subr.mxu0 0.0
        %988 = vmatpush2.msra.mxu0 0.0
        %989 = vmatprep.subr.mxu0 0.0
        %990 = vmatpush2.msra.mxu0 0.0
        %991 = vmatprep.subr.mxu0 0.0
        %992 = vmatpush2.msra.mxu0 0.0
        %993 = vmatprep.subr.mxu0 0.0
        %994 = vmatpush2.msra.mxu0 0.0
        %995 = vmatprep.subr.mxu0 0.0
        %996 = vmatpush2.msra.mxu0 0.0
        %997 = vmatprep.subr.mxu0 0.0
        %998 = vmatpush2.msra.mxu0 0.0
        %999 = vmatprep.subr.mxu0 0.0
        %1000 = vmatpush2.msra.mxu0 0.0
        %1001 = vmatprep.subr.mxu0 0.0
        %1002 = vmatpush2.msra.mxu0 0.0
        %1003 = vmatprep.subr.mxu0 0.0
        %1004 = vmatpush2.msra.mxu0 0.0
        %1005 = vmatprep.subr.mxu0 0.0
        %1006 = vmatpush2.msra.mxu0 0.0
        %1007 = vmatprep.subr.mxu0 0.0
        %1008 = vmatpush2.msra.mxu0 0.0
        %1009 = vmatprep.subr.mxu0 0.0
        %1010 = vmatpush2.msra.mxu0 0.0
        %1011 = vmatprep.subr.mxu0 0.0
        %1012 = vmatpush2.msra.mxu0 0.0
        %1013 = vmatprep.subr.mxu0 0.0
        %1014 = vmatpush2.msra.mxu0 0.0
        %1015 = vmatprep.subr.mxu0 0.0
        %1016 = vmatpush2.msra.mxu0 0.0
        %1017 = vmatprep.mubr.f32.mxu0 0.0
        %1018 = vmatmul.mubr.f32.gmra.mxu0 %v951
        %v1019 = vpop.f32.mrf.mxu0
        %v1020 = vadd.f32 %v948, %v1019
        %v1021 = vpop.f32.mrf.mxu0
        %1022 = vdwg.mxu0
        %1023 = vst [vmem:[%s416] sm:$0xff] %v1020
        %s1024 = sand.u32 %s273, 1
        %s1025 = scalar_lea.sflag [#allocation4], %s1024
        %s1026 = sand.u32 %s273, 1
        %s1027 = smul.addr %s1026, 8
        %s1028 = scalar_lea.vmem [#allocation7], %s1027
        // Predicated region
        $region73: #{tpu_custom_call.1} parent=63 // pred_check
          %p1029 = pneg %p283
        $region74: #{tpu_custom_call.1} parent=63 // pred_check_branch
          %1031 = sbr.rel (%p1029) target = $region76
        $region75: #{tpu_custom_call.1} parent=63 // pred_region
          %s1033 = ssub.s32 128, 128
          %1034 = vsyncadd %s1025, %s1033
          %s1035 = smul.addr %s29, 128
          %s1036 = scalar_lea.hbm %s11, %s1035
          %s1038 = sshll.u32 %s1028, 4
          %s1039 = int_to_ptr.vmem [resolvable:$true] %s1038
          %1041 = dma.vmem_to_hbm [thread:$0]  %s1039, 128, %s1036, %s1025
        $region76: #{tpu_custom_call.1} parent=63 // pred_fallthru
          _
      $region64: #{tpu_custom_call.1} parent=5 // pred_fallthru
        _
      %p1042 = scmp.le.s32.totalorder 2, %s24
      // Predicated region
      $region77: #{tpu_custom_call.1} parent=5 // pred_check
        %p1043 = pneg %p1042
      $region78: #{tpu_custom_call.1} parent=5 // pred_check_branch
        %1045 = sbr.rel (%p1043) target = $region80
      $region79: #{tpu_custom_call.1} parent=5 // pred_region
        %s1046 = ssub.s32 %s24, 2
        // Predicated region
        $region81: #{tpu_custom_call.1} parent=79 // pred_check
          %p1047 = pneg %p289
        $region82: #{tpu_custom_call.1} parent=79 // pred_check_branch
          %1049 = sbr.rel (%p1047) target = $region84
        $region83: #{tpu_custom_call.1} parent=79 // pred_region
          %s1050 = sand.u32 %s274, 1
          %s1051 = scalar_lea.sflag [#allocation4], %s1050
          %s1052 = sand.u32 %s274, 1
          %s1053 = smul.addr %s1052, 8
          %s1054 = scalar_lea.vmem [#allocation7], %s1053
          %1055 = dma.done %s1051, 128
        $region84: #{tpu_custom_call.1} parent=79 // pred_fallthru
          _
      $region80: #{tpu_custom_call.1} parent=5 // pred_fallthru
        _
    $region6: #{tpu_custom_call.1} parent=1 // loop_footer
      %s28 = sadd.s32 1, %s24
    $region7: #{tpu_custom_call.1} parent=1 // loop_footer_branch
      %23 = sbr.rel target = $region3
    $region8: #{tpu_custom_call.1} parent=1 // loop_exit
      _
    %1056 = vsyncpa [#allocation3], 1
    %s1057 = scalar_lea.sflag [#allocation3], 1
    %1058 = vsyncpa %s1057, 1
    %1059 = vsyncpa [#allocation6], 1
    %1060 = vsyncpa [#allocation4], 1
    %s1061 = scalar_lea.sflag [#allocation4], 1
    %1062 = vsyncpa %s1061, 1

</llo_original>
